<compile_context>
chip_gen: v7x
topology: tpu7x:2x2x1
jax: 0.10.0
libtpu: 0.0.40
codegen_flags: <defaults>
</compile_context>

<pallas_src>
import math
import numpy as np
import jax
import jax.numpy as jnp
from jax.experimental import pallas as pl
from jax.experimental.pallas import tpu as pltpu

# ---------------- model hyper-parameters (DeepPixelPose defaults) -----------
D_LAYERS = 8          # number of hidden Linear layers
W = 256               # hidden width
SKIP = 4              # skip connection after layer index 4
X_MULTIRES = 10       # positional encoding for 3-D points
T_MULTIRES = 10       # positional encoding for scalar cam id
IN_CH_X = 3 * (1 + 2 * X_MULTIRES)   # 63
IN_CH_T = 1 * (1 + 2 * T_MULTIRES)   # 21
IN_CH = IN_CH_X + IN_CH_T            # 84
IN_PAD = 96           # padded feature width (84 -> 96, sublane aligned)
OUT_W = 8             # padded output head width (real outputs: 6)
B_PAD = 8             # pad the batch (=1) to 8 sublanes
N_MID = 7             # (W, W) weights: layers 1,2,3,4, skip-5 h-part, 6, 7


# ---------------- Pallas kernel: the 8-layer MLP + output head --------------
def _mlp_kernel(idx_ref, feat_ref, wfeat_ref, bias_ref, wout_ref, bout_ref,
                wmid_hbm, out_ref, wmid_buf, copy_sems):
    seg = idx_ref[0]

    # Kick off the seven (W, W) mid-layer weight DMAs immediately; they land
    # while the serialized early layers run (overlap weight DMA with compute).
    def mid_copy(j):
        return pltpu.make_async_copy(wmid_hbm.at[seg, j], wmid_buf.at[j],
                                     copy_sems.at[j])

    for j in range(N_MID):
        mid_copy(j).start()

    feat = feat_ref[...].astype(jnp.bfloat16)                  # (8, 96) bf16

    # Fused feat matmul: layer-0 pre-activation and layer-5 skip term.
    feat2 = jnp.dot(feat, wfeat_ref[...],
                    preferred_element_type=jnp.float32)        # (8, 512) f32
    h = jnp.maximum(feat2[:, :W] + bias_ref[0:1, :], 0.0)      # layer 0
    skip = feat2[:, W:]                                        # feat @ w5_feat

    def mid_dot(j, x):
        mid_copy(j).wait()                                     # chunk j landed
        return jnp.dot(x.astype(jnp.bfloat16), wmid_buf[j],
                       preferred_element_type=jnp.float32)

    for j in range(4):                                         # layers 1..4
        h = jnp.maximum(mid_dot(j, h) + bias_ref[j + 1:j + 2, :], 0.0)

    # layer 5: input is concat([features, h]) -> split-weight matmul
    h = jnp.maximum(mid_dot(4, h) + skip + bias_ref[5:6, :], 0.0)

    for j in range(5, 7):                                      # layers 6..7
        h = jnp.maximum(mid_dot(j, h) + bias_ref[j + 1:j + 2, :], 0.0)

    # output head: W -> 8 lanes (real outputs live in cols 0..5), f32
    out_ref[...] = (jnp.dot(h, wout_ref[...],
                            preferred_element_type=jnp.float32)
                    + bout_ref[...])


def _seg_spec(shape):
    """Stacked (P, *shape) param: select segment via scalar-prefetch idx."""
    ndim = len(shape)
    return pl.BlockSpec((None,) + shape,
                        lambda i, idx_ref, _n=ndim: (idx_ref[0],) + (0,) * _n)


def run_pose_mlp(idx, feat_pad, params):
    """idx: (1,) int32 segment index; feat_pad: (8, 96). Returns (8, 8) f32."""
    grid_spec = pltpu.PrefetchScalarGridSpec(
        num_scalar_prefetch=1,
        grid=(1,),
        in_specs=[
            pl.BlockSpec((B_PAD, IN_PAD), lambda i, idx_ref: (0, 0)),  # feat
            _seg_spec((IN_PAD, 2 * W)),         # wfeat = [w0 | w5_feat], bf16
            _seg_spec((D_LAYERS, W)),           # biases b0..b7, f32
            _seg_spec((W, OUT_W)),              # wout, f32
            _seg_spec((1, OUT_W)),              # bout, f32
            pl.BlockSpec(memory_space=pl.ANY),  # wmid stack, bf16, manual DMA
        ],
        out_specs=pl.BlockSpec((B_PAD, OUT_W), lambda i, idx_ref: (0, 0)),
        scratch_shapes=[
            pltpu.VMEM((N_MID, W, W), jnp.bfloat16),
            pltpu.SemaphoreType.DMA((N_MID,)),
        ],
    )
    return pl.pallas_call(
        _mlp_kernel,
        out_shape=jax.ShapeDtypeStruct((B_PAD, OUT_W), jnp.float32),
        grid_spec=grid_spec,
        compiler_params=pltpu.CompilerParams(
            dimension_semantics=("arbitrary",)),
    )(idx, feat_pad,
      params['wfeat'], params['bias'], params['wout'], params['bout'],
      params['wmid'])


# ---------------- plain-JAX glue ---------------------------------------------
def nerf_embed(x, multires):
    """NeRF get_embedder: [x, sin(2^0 x), cos(2^0 x), ..., sin(2^(L-1) x), cos(...)]."""
    feats = [x]
    for i in range(multires):
        f = 2.0 ** i
        feats.append(jnp.sin(x * f))
        feats.append(jnp.cos(x * f))
    return jnp.concatenate(feats, axis=-1)


def make_c2w(r, t):
    """Rodrigues exp-map of axis-angle r (3,) plus translation t (3,) -> (3,4)."""
    skew = jnp.stack([
        jnp.stack([jnp.zeros(()), -r[2], r[1]]),
        jnp.stack([r[2], jnp.zeros(()), -r[0]]),
        jnp.stack([-r[1], r[0], jnp.zeros(())]),
    ])
    theta = jnp.linalg.norm(r) + 1e-15
    eye = jnp.eye(3, dtype=jnp.float32)
    R = (eye
         + (jnp.sin(theta) / theta) * skew
         + ((1.0 - jnp.cos(theta)) / theta ** 2) * (skew @ skew))
    return jnp.concatenate([R, t[:, None]], axis=1)


def init_params(key, pose_mlp_num):
    """Deterministic per-segment DeepPixelPose parameters, stacked over segments.

    Layout (per segment p):
      wfeat : (96, 512)  bf16  fused [w0 | w5_feat], rows zero-padded 84->96
      wmid  : (7, 256, 256) bf16  [l1, l2, l3, l4, l5(h-part), l6, l7]
      bias  : (8, 256)   f32   [b0, b1, b2, b3, b4, b5, b6, b7]
      wout  : (256, 8)   f32   output head, cols zero-padded 6->8
      bout  : (1, 8)     f32
    """
    def linear(k, fan_in, fan_out):
        kw, kb = jax.random.split(k)
        bound = 1.0 / math.sqrt(fan_in)
        w = jax.random.uniform(kw, (fan_in, fan_out), jnp.float32, -bound, bound)
        b = jax.random.uniform(kb, (fan_out,), jnp.float32, -bound, bound)
        return w, b

    wfeats, biases, wmids, wouts, bouts = [], [], [], [], []
    keys = jax.random.split(key, pose_mlp_num)
    for p in range(pose_mlp_num):
        ks = jax.random.split(keys[p], 16)
        w0, b0 = linear(ks[0], IN_CH, W)
        # hidden layers 1,2,3,4,6,7 are (W, W)
        wm, bm = [], []
        for j in range(6):
            w, b = linear(ks[1 + j], W, W)
            wm.append(w)
            bm.append(b)
        # skip layer 5: Linear(W + IN_CH, W); concat order is [features, h]
        w5, b5 = linear(ks[7], W + IN_CH, W)
        # output head: 'small_weight' init -> N(0, 0.01) weight, zero bias
        wout = 0.01 * jax.random.normal(ks[8], (W, 6), jnp.float32)
        bout = jnp.zeros((6,), jnp.float32)

        wfeat = jnp.concatenate([w0, w5[:IN_CH]], axis=1)           # (84, 512)
        wfeat = jnp.pad(wfeat, ((0, IN_PAD - IN_CH), (0, 0)))       # (96, 512)
        wmid = jnp.stack(wm[:4] + [w5[IN_CH:]] + wm[4:])            # (7, 256, 256)
        bias = jnp.stack([b0] + bm[:4] + [b5] + bm[4:])             # (8, 256)
        wout_p = jnp.pad(wout, ((0, 0), (0, OUT_W - 6)))            # (256, 8)
        bout_p = jnp.pad(bout, ((0, OUT_W - 6),))[None, :]          # (1, 8)

        wfeats.append(wfeat); biases.append(bias); wmids.append(wmid)
        wouts.append(wout_p); bouts.append(bout_p)

    return dict(
        wfeat=jnp.stack(wfeats).astype(jnp.bfloat16),
        bias=jnp.stack(biases),
        wmid=jnp.stack(wmids).astype(jnp.bfloat16),
        wout=jnp.stack(wouts),
        bout=jnp.stack(bouts),
    )


def build_features(cam_id, num_cams):
    """disable_pts=True features: PE(zeros(3)) ++ PE(cam_id / num_cams), padded to 96."""
    t = cam_id.astype(jnp.float32) / float(num_cams)
    t_feat = nerf_embed(t[None], T_MULTIRES)                              # (21,)
    pts_feat = nerf_embed(jnp.zeros((3,), jnp.float32), X_MULTIRES)       # (63,)
    feat = jnp.concatenate([pts_feat, t_feat])                            # (84,)
    feat = jnp.pad(feat, (0, IN_PAD - IN_CH))                             # (96,)
    return jnp.broadcast_to(feat[None, :], (B_PAD, IN_PAD))


def seg_deep_pixel_pose_forward(params, init_c2w, cam_id, num_cams, segment_img_num):
    idx = (cam_id // segment_img_num).astype(jnp.int32)[None]   # (1,) scalar prefetch
    feat_pad = build_features(cam_id, num_cams)

    pred = run_pose_mlp(idx, feat_pad, params)[0, :6]            # (6,)

    rotation, translation = pred[:3], pred[3:]
    c2w = make_c2w(rotation, translation)                        # (3, 4)
    c2w = c2w @ init_c2w[cam_id]                                 # (3,4) @ (4,4) -> (3,4)
    return c2w


# ---------------- pure-JAX reference (for correctness check) ----------------
def reference_forward(params, init_c2w, cam_id, num_cams, segment_img_num):
    idx = int(cam_id) // segment_img_num
    feat = build_features(cam_id, num_cams)[:1, :IN_CH]          # (1, 84)
    hp = jax.lax.Precision.HIGHEST
    f32 = lambda a: a.astype(jnp.float32)

    wfeat = f32(params['wfeat'][idx])[:IN_CH]                    # (84, 512)
    w0, w5f = wfeat[:, :W], wfeat[:, W:]
    wmid = f32(params['wmid'][idx])                              # (7, 256, 256)
    bias = params['bias'][idx]                                   # (8, 256)
    wout = params['wout'][idx][:, :6]
    bout = params['bout'][idx][:, :6]

    h = jax.nn.relu(jnp.dot(feat, w0, precision=hp) + bias[0])
    for j in range(4):
        h = jax.nn.relu(jnp.dot(h, wmid[j], precision=hp) + bias[j + 1])
    h = jax.nn.relu(jnp.dot(feat, w5f, precision=hp)
                    + jnp.dot(h, wmid[4], precision=hp) + bias[5])
    for j in range(5, 7):
        h = jax.nn.relu(jnp.dot(h, wmid[j], precision=hp) + bias[j + 1])
    pred = (jnp.dot(h, wout, precision=hp) + bout)[0]
    c2w = make_c2w(pred[:3], pred[3:])
    return c2w @ init_c2w[int(cam_id)]


# ---------------- main -------------------------------------------------------
if __name__ == "__main__":
    num_cams = 8
    segment_img_num = 4
    pose_mlp_num = (num_cams + segment_img_num - 1) // segment_img_num  # 2

    root = jax.random.PRNGKey(0)
    k_params, k_c2w = jax.random.split(root)

    params = init_params(k_params, pose_mlp_num)

    # deterministic init_c2w: identity rotation + small random translation
    trans = 0.1 * jax.random.normal(k_c2w, (num_cams, 3), jnp.float32)
    init_c2w = jnp.tile(jnp.eye(4, dtype=jnp.float32), (num_cams, 1, 1))
    init_c2w = init_c2w.at[:, :3, 3].set(trans)

    cam_id = jnp.array(5, dtype=jnp.int32)   # -> segment MLP index 1

    fwd = jax.jit(seg_deep_pixel_pose_forward, static_argnums=(3, 4))
    c2w = fwd(params, init_c2w, cam_id, num_cams, segment_img_num)
    c2w = jax.block_until_ready(c2w)

    assert c2w.shape == (3, 4), c2w.shape
    assert bool(jnp.all(jnp.isfinite(c2w)))

    ref = reference_forward(params, init_c2w, cam_id, num_cams, segment_img_num)
    np.testing.assert_allclose(np.asarray(c2w), np.asarray(ref), rtol=2e-2, atol=2e-2)

    print("KERNEL_OK")
</pallas_src>

<mosaic_0001>
module attributes {stable_mosaic.version = 11 : i64} {
  func.func @_mlp_kernel(%arg0: i32, %arg1: memref<1xi32, #tpu.memory_space<smem>>, %arg2: memref<8x96xf32, #tpu.memory_space<vmem>>, %arg3: memref<1x96x512xbf16, #tpu.memory_space<vmem>>, %arg4: memref<1x8x256xf32, #tpu.memory_space<vmem>>, %arg5: memref<1x256x8xf32, #tpu.memory_space<vmem>>, %arg6: memref<1x1x8xf32, #tpu.memory_space<vmem>>, %arg7: memref<2x7x256x256xbf16, #tpu.memory_space<any>>, %arg8: memref<8x8xf32, #tpu.memory_space<vmem>>, %arg9: memref<7x256x256xbf16, #tpu.memory_space<vmem>>, %arg10: memref<7x!tpu.dma_semaphore, #tpu.memory_space<semaphore_mem>>) attributes {dimension_semantics = [#tpu.dimension_semantics<arbitrary>], iteration_bounds = array<i64: 1>, scalar_prefetch = 1 : i64, scratch_operands = 2 : i64, tpu.core_type = #tpu.core_type<tc>, window_params = [{pipeline_mode = #tpu.pipeline_mode<synchronous>, transform_indices = @transform_0, window_bounds = array<i64: 8, 96>}, {transform_indices = @transform_1, window_bounds = array<i64: 1, 96, 512>}, {transform_indices = @transform_2, window_bounds = array<i64: 1, 8, 256>}, {transform_indices = @transform_3, window_bounds = array<i64: 1, 256, 8>}, {transform_indices = @transform_4, window_bounds = array<i64: 1, 1, 8>}, {}, {pipeline_mode = #tpu.pipeline_mode<synchronous>, transform_indices = @transform_6, window_bounds = array<i64: 8, 8>}]} {
    %c0 = arith.constant 0 : index
    %0 = memref.load %arg1[%c0] : memref<1xi32, #tpu.memory_space<smem>>
    %c0_i32 = arith.constant 0 : i32
    %c0_i32_0 = arith.constant 0 : i32
    %c0_i32_1 = arith.constant 0 : i32
    %c0_i32_2 = arith.constant 0 : i32
    %c0_i32_3 = arith.constant 0 : i32
    %1 = tpu.memref_slice %arg7[%0, %c0_i32, %c0_i32_2, %c0_i32_3] : memref<2x7x256x256xbf16, #tpu.memory_space<any>> -> memref<1x1x256x256xbf16, #tpu.memory_space<any>>
    %2 = tpu.memref_squeeze %1 : memref<1x1x256x256xbf16, #tpu.memory_space<any>> -> memref<256x256xbf16, #tpu.memory_space<any>>
    %c0_i32_4 = arith.constant 0 : i32
    %c0_i32_5 = arith.constant 0 : i32
    %3 = tpu.memref_slice %arg9[%c0_i32_0, %c0_i32_4, %c0_i32_5] : memref<7x256x256xbf16, #tpu.memory_space<vmem>> -> memref<1x256x256xbf16, #tpu.memory_space<vmem>>
    %4 = tpu.memref_squeeze %3 : memref<1x256x256xbf16, #tpu.memory_space<vmem>> -> memref<256x256xbf16, #tpu.memory_space<vmem>>
    %5 = tpu.memref_slice %arg10[%c0_i32_1] : memref<7x!tpu.dma_semaphore, #tpu.memory_space<semaphore_mem>> -> memref<1x!tpu.dma_semaphore, #tpu.memory_space<semaphore_mem>>
    %6 = tpu.memref_squeeze %5 : memref<1x!tpu.dma_semaphore, #tpu.memory_space<semaphore_mem>> -> memref<!tpu.dma_semaphore, #tpu.memory_space<semaphore_mem>>
    tpu.enqueue_dma source(%2 : memref<256x256xbf16, #tpu.memory_space<any>>) target(%4 : memref<256x256xbf16, #tpu.memory_space<vmem>>) target_semaphore(%6 : memref<!tpu.dma_semaphore, #tpu.memory_space<semaphore_mem>>)
    %c1_i32 = arith.constant 1 : i32
    %c1_i32_6 = arith.constant 1 : i32
    %c1_i32_7 = arith.constant 1 : i32
    %c0_i32_8 = arith.constant 0 : i32
    %c0_i32_9 = arith.constant 0 : i32
    %7 = tpu.memref_slice %arg7[%0, %c1_i32, %c0_i32_8, %c0_i32_9] : memref<2x7x256x256xbf16, #tpu.memory_space<any>> -> memref<1x1x256x256xbf16, #tpu.memory_space<any>>
    %8 = tpu.memref_squeeze %7 : memref<1x1x256x256xbf16, #tpu.memory_space<any>> -> memref<256x256xbf16, #tpu.memory_space<any>>
    %c0_i32_10 = arith.constant 0 : i32
    %c0_i32_11 = arith.constant 0 : i32
    %9 = tpu.memref_slice %arg9[%c1_i32_6, %c0_i32_10, %c0_i32_11] : memref<7x256x256xbf16, #tpu.memory_space<vmem>> -> memref<1x256x256xbf16, #tpu.memory_space<vmem>>
    %10 = tpu.memref_squeeze %9 : memref<1x256x256xbf16, #tpu.memory_space<vmem>> -> memref<256x256xbf16, #tpu.memory_space<vmem>>
    %11 = tpu.memref_slice %arg10[%c1_i32_7] : memref<7x!tpu.dma_semaphore, #tpu.memory_space<semaphore_mem>> -> memref<1x!tpu.dma_semaphore, #tpu.memory_space<semaphore_mem>>
    %12 = tpu.memref_squeeze %11 : memref<1x!tpu.dma_semaphore, #tpu.memory_space<semaphore_mem>> -> memref<!tpu.dma_semaphore, #tpu.memory_space<semaphore_mem>>
    tpu.enqueue_dma source(%8 : memref<256x256xbf16, #tpu.memory_space<any>>) target(%10 : memref<256x256xbf16, #tpu.memory_space<vmem>>) target_semaphore(%12 : memref<!tpu.dma_semaphore, #tpu.memory_space<semaphore_mem>>)
    %c2_i32 = arith.constant 2 : i32
    %c2_i32_12 = arith.constant 2 : i32
    %c2_i32_13 = arith.constant 2 : i32
    %c0_i32_14 = arith.constant 0 : i32
    %c0_i32_15 = arith.constant 0 : i32
    %13 = tpu.memref_slice %arg7[%0, %c2_i32, %c0_i32_14, %c0_i32_15] : memref<2x7x256x256xbf16, #tpu.memory_space<any>> -> memref<1x1x256x256xbf16, #tpu.memory_space<any>>
    %14 = tpu.memref_squeeze %13 : memref<1x1x256x256xbf16, #tpu.memory_space<any>> -> memref<256x256xbf16, #tpu.memory_space<any>>
    %c0_i32_16 = arith.constant 0 : i32
    %c0_i32_17 = arith.constant 0 : i32
    %15 = tpu.memref_slice %arg9[%c2_i32_12, %c0_i32_16, %c0_i32_17] : memref<7x256x256xbf16, #tpu.memory_space<vmem>> -> memref<1x256x256xbf16, #tpu.memory_space<vmem>>
    %16 = tpu.memref_squeeze %15 : memref<1x256x256xbf16, #tpu.memory_space<vmem>> -> memref<256x256xbf16, #tpu.memory_space<vmem>>
    %17 = tpu.memref_slice %arg10[%c2_i32_13] : memref<7x!tpu.dma_semaphore, #tpu.memory_space<semaphore_mem>> -> memref<1x!tpu.dma_semaphore, #tpu.memory_space<semaphore_mem>>
    %18 = tpu.memref_squeeze %17 : memref<1x!tpu.dma_semaphore, #tpu.memory_space<semaphore_mem>> -> memref<!tpu.dma_semaphore, #tpu.memory_space<semaphore_mem>>
    tpu.enqueue_dma source(%14 : memref<256x256xbf16, #tpu.memory_space<any>>) target(%16 : memref<256x256xbf16, #tpu.memory_space<vmem>>) target_semaphore(%18 : memref<!tpu.dma_semaphore, #tpu.memory_space<semaphore_mem>>)
    %c3_i32 = arith.constant 3 : i32
    %c3_i32_18 = arith.constant 3 : i32
    %c3_i32_19 = arith.constant 3 : i32
    %c0_i32_20 = arith.constant 0 : i32
    %c0_i32_21 = arith.constant 0 : i32
    %19 = tpu.memref_slice %arg7[%0, %c3_i32, %c0_i32_20, %c0_i32_21] : memref<2x7x256x256xbf16, #tpu.memory_space<any>> -> memref<1x1x256x256xbf16, #tpu.memory_space<any>>
    %20 = tpu.memref_squeeze %19 : memref<1x1x256x256xbf16, #tpu.memory_space<any>> -> memref<256x256xbf16, #tpu.memory_space<any>>
    %c0_i32_22 = arith.constant 0 : i32
    %c0_i32_23 = arith.constant 0 : i32
    %21 = tpu.memref_slice %arg9[%c3_i32_18, %c0_i32_22, %c0_i32_23] : memref<7x256x256xbf16, #tpu.memory_space<vmem>> -> memref<1x256x256xbf16, #tpu.memory_space<vmem>>
    %22 = tpu.memref_squeeze %21 : memref<1x256x256xbf16, #tpu.memory_space<vmem>> -> memref<256x256xbf16, #tpu.memory_space<vmem>>
    %23 = tpu.memref_slice %arg10[%c3_i32_19] : memref<7x!tpu.dma_semaphore, #tpu.memory_space<semaphore_mem>> -> memref<1x!tpu.dma_semaphore, #tpu.memory_space<semaphore_mem>>
    %24 = tpu.memref_squeeze %23 : memref<1x!tpu.dma_semaphore, #tpu.memory_space<semaphore_mem>> -> memref<!tpu.dma_semaphore, #tpu.memory_space<semaphore_mem>>
    tpu.enqueue_dma source(%20 : memref<256x256xbf16, #tpu.memory_space<any>>) target(%22 : memref<256x256xbf16, #tpu.memory_space<vmem>>) target_semaphore(%24 : memref<!tpu.dma_semaphore, #tpu.memory_space<semaphore_mem>>)
    %c4_i32 = arith.constant 4 : i32
    %c4_i32_24 = arith.constant 4 : i32
    %c4_i32_25 = arith.constant 4 : i32
    %c0_i32_26 = arith.constant 0 : i32
    %c0_i32_27 = arith.constant 0 : i32
    %25 = tpu.memref_slice %arg7[%0, %c4_i32, %c0_i32_26, %c0_i32_27] : memref<2x7x256x256xbf16, #tpu.memory_space<any>> -> memref<1x1x256x256xbf16, #tpu.memory_space<any>>
    %26 = tpu.memref_squeeze %25 : memref<1x1x256x256xbf16, #tpu.memory_space<any>> -> memref<256x256xbf16, #tpu.memory_space<any>>
    %c0_i32_28 = arith.constant 0 : i32
    %c0_i32_29 = arith.constant 0 : i32
    %27 = tpu.memref_slice %arg9[%c4_i32_24, %c0_i32_28, %c0_i32_29] : memref<7x256x256xbf16, #tpu.memory_space<vmem>> -> memref<1x256x256xbf16, #tpu.memory_space<vmem>>
    %28 = tpu.memref_squeeze %27 : memref<1x256x256xbf16, #tpu.memory_space<vmem>> -> memref<256x256xbf16, #tpu.memory_space<vmem>>
    %29 = tpu.memref_slice %arg10[%c4_i32_25] : memref<7x!tpu.dma_semaphore, #tpu.memory_space<semaphore_mem>> -> memref<1x!tpu.dma_semaphore, #tpu.memory_space<semaphore_mem>>
    %30 = tpu.memref_squeeze %29 : memref<1x!tpu.dma_semaphore, #tpu.memory_space<semaphore_mem>> -> memref<!tpu.dma_semaphore, #tpu.memory_space<semaphore_mem>>
    tpu.enqueue_dma source(%26 : memref<256x256xbf16, #tpu.memory_space<any>>) target(%28 : memref<256x256xbf16, #tpu.memory_space<vmem>>) target_semaphore(%30 : memref<!tpu.dma_semaphore, #tpu.memory_space<semaphore_mem>>)
    %c5_i32 = arith.constant 5 : i32
    %c5_i32_30 = arith.constant 5 : i32
    %c5_i32_31 = arith.constant 5 : i32
    %c0_i32_32 = arith.constant 0 : i32
    %c0_i32_33 = arith.constant 0 : i32
    %31 = tpu.memref_slice %arg7[%0, %c5_i32, %c0_i32_32, %c0_i32_33] : memref<2x7x256x256xbf16, #tpu.memory_space<any>> -> memref<1x1x256x256xbf16, #tpu.memory_space<any>>
    %32 = tpu.memref_squeeze %31 : memref<1x1x256x256xbf16, #tpu.memory_space<any>> -> memref<256x256xbf16, #tpu.memory_space<any>>
    %c0_i32_34 = arith.constant 0 : i32
    %c0_i32_35 = arith.constant 0 : i32
    %33 = tpu.memref_slice %arg9[%c5_i32_30, %c0_i32_34, %c0_i32_35] : memref<7x256x256xbf16, #tpu.memory_space<vmem>> -> memref<1x256x256xbf16, #tpu.memory_space<vmem>>
    %34 = tpu.memref_squeeze %33 : memref<1x256x256xbf16, #tpu.memory_space<vmem>> -> memref<256x256xbf16, #tpu.memory_space<vmem>>
    %35 = tpu.memref_slice %arg10[%c5_i32_31] : memref<7x!tpu.dma_semaphore, #tpu.memory_space<semaphore_mem>> -> memref<1x!tpu.dma_semaphore, #tpu.memory_space<semaphore_mem>>
    %36 = tpu.memref_squeeze %35 : memref<1x!tpu.dma_semaphore, #tpu.memory_space<semaphore_mem>> -> memref<!tpu.dma_semaphore, #tpu.memory_space<semaphore_mem>>
    tpu.enqueue_dma source(%32 : memref<256x256xbf16, #tpu.memory_space<any>>) target(%34 : memref<256x256xbf16, #tpu.memory_space<vmem>>) target_semaphore(%36 : memref<!tpu.dma_semaphore, #tpu.memory_space<semaphore_mem>>)
    %c6_i32 = arith.constant 6 : i32
    %c6_i32_36 = arith.constant 6 : i32
    %c6_i32_37 = arith.constant 6 : i32
    %c0_i32_38 = arith.constant 0 : i32
    %c0_i32_39 = arith.constant 0 : i32
    %37 = tpu.memref_slice %arg7[%0, %c6_i32, %c0_i32_38, %c0_i32_39] : memref<2x7x256x256xbf16, #tpu.memory_space<any>> -> memref<1x1x256x256xbf16, #tpu.memory_space<any>>
    %38 = tpu.memref_squeeze %37 : memref<1x1x256x256xbf16, #tpu.memory_space<any>> -> memref<256x256xbf16, #tpu.memory_space<any>>
    %c0_i32_40 = arith.constant 0 : i32
    %c0_i32_41 = arith.constant 0 : i32
    %39 = tpu.memref_slice %arg9[%c6_i32_36, %c0_i32_40, %c0_i32_41] : memref<7x256x256xbf16, #tpu.memory_space<vmem>> -> memref<1x256x256xbf16, #tpu.memory_space<vmem>>
    %40 = tpu.memref_squeeze %39 : memref<1x256x256xbf16, #tpu.memory_space<vmem>> -> memref<256x256xbf16, #tpu.memory_space<vmem>>
    %41 = tpu.memref_slice %arg10[%c6_i32_37] : memref<7x!tpu.dma_semaphore, #tpu.memory_space<semaphore_mem>> -> memref<1x!tpu.dma_semaphore, #tpu.memory_space<semaphore_mem>>
    %42 = tpu.memref_squeeze %41 : memref<1x!tpu.dma_semaphore, #tpu.memory_space<semaphore_mem>> -> memref<!tpu.dma_semaphore, #tpu.memory_space<semaphore_mem>>
    tpu.enqueue_dma source(%38 : memref<256x256xbf16, #tpu.memory_space<any>>) target(%40 : memref<256x256xbf16, #tpu.memory_space<vmem>>) target_semaphore(%42 : memref<!tpu.dma_semaphore, #tpu.memory_space<semaphore_mem>>)
    %c0_42 = arith.constant 0 : index
    %c0_43 = arith.constant 0 : index
    %43 = vector.load %arg2[%c0_42, %c0_43] : memref<8x96xf32, #tpu.memory_space<vmem>>, vector<8x96xf32>
    %44 = arith.truncf %43 : vector<8x96xf32> to vector<8x96xbf16>
    %c0_44 = arith.constant 0 : index
    %c0_45 = arith.constant 0 : index
    %c0_46 = arith.constant 0 : index
    %45 = vector.load %arg3[%c0_44, %c0_45, %c0_46] : memref<1x96x512xbf16, #tpu.memory_space<vmem>>, vector<1x96x512xbf16>
    %46 = vector.shape_cast %45 : vector<1x96x512xbf16> to vector<96x512xbf16>
    %cst = arith.constant dense<0.000000e+00> : vector<8x512xf32>
    %47 = tpu.matmul %44, %46, %cst {dimension_numbers = #tpu.dot_dimension_numbers<[1], [0], [0], [1], [0, 0, 1, 1], [], []>} : vector<8x96xbf16>, vector<96x512xbf16>, vector<8x512xf32> -> vector<8x512xf32>
    %48 = vector.extract_strided_slice %47 {offsets = [0, 0], sizes = [8, 256], strides = [1, 1]} : vector<8x512xf32> to vector<8x256xf32>
    %c0_47 = arith.constant 0 : index
    %c0_48 = arith.constant 0 : index
    %c0_49 = arith.constant 0 : index
    %49 = vector.load %arg4[%c0_47, %c0_48, %c0_49] : memref<1x8x256xf32, #tpu.memory_space<vmem>>, vector<1x1x256xf32>
    %50 = vector.shape_cast %49 : vector<1x1x256xf32> to vector<1x256xf32>
    %51 = vector.broadcast %50 : vector<1x256xf32> to vector<8x256xf32>
    %52 = arith.addf %48, %51 : vector<8x256xf32>
    %cst_50 = arith.constant 0.000000e+00 : f32
    %53 = vector.broadcast %cst_50 : f32 to vector<8x256xf32>
    %54 = arith.maximumf %52, %53 : vector<8x256xf32>
    %55 = vector.extract_strided_slice %47 {offsets = [0, 256], sizes = [8, 256], strides = [1, 1]} : vector<8x512xf32> to vector<8x256xf32>
    %c0_i32_51 = arith.constant 0 : i32
    %c0_i32_52 = arith.constant 0 : i32
    %c0_i32_53 = arith.constant 0 : i32
    %c0_i32_54 = arith.constant 0 : i32
    %c0_i32_55 = arith.constant 0 : i32
    %56 = tpu.memref_slice %arg7[%0, %c0_i32_51, %c0_i32_54, %c0_i32_55] : memref<2x7x256x256xbf16, #tpu.memory_space<any>> -> memref<1x1x256x256xbf16, #tpu.memory_space<any>>
    %57 = tpu.memref_squeeze %56 : memref<1x1x256x256xbf16, #tpu.memory_space<any>> -> memref<256x256xbf16, #tpu.memory_space<any>>
    %c0_i32_56 = arith.constant 0 : i32
    %c0_i32_57 = arith.constant 0 : i32
    %58 = tpu.memref_slice %arg9[%c0_i32_52, %c0_i32_56, %c0_i32_57] : memref<7x256x256xbf16, #tpu.memory_space<vmem>> -> memref<1x256x256xbf16, #tpu.memory_space<vmem>>
    %59 = tpu.memref_squeeze %58 : memref<1x256x256xbf16, #tpu.memory_space<vmem>> -> memref<256x256xbf16, #tpu.memory_space<vmem>>
    %60 = tpu.memref_slice %arg10[%c0_i32_53] : memref<7x!tpu.dma_semaphore, #tpu.memory_space<semaphore_mem>> -> memref<1x!tpu.dma_semaphore, #tpu.memory_space<semaphore_mem>>
    %61 = tpu.memref_squeeze %60 : memref<1x!tpu.dma_semaphore, #tpu.memory_space<semaphore_mem>> -> memref<!tpu.dma_semaphore, #tpu.memory_space<semaphore_mem>>
    tpu.wait_dma2 semaphore(%61 : memref<!tpu.dma_semaphore, #tpu.memory_space<semaphore_mem>>) src(%57 : memref<256x256xbf16, #tpu.memory_space<any>>) dst(%59 : memref<256x256xbf16, #tpu.memory_space<vmem>>)
    %62 = arith.truncf %54 : vector<8x256xf32> to vector<8x256xbf16>
    %c0_58 = arith.constant 0 : index
    %c0_59 = arith.constant 0 : index
    %c0_60 = arith.constant 0 : index
    %63 = vector.load %arg9[%c0_58, %c0_59, %c0_60] : memref<7x256x256xbf16, #tpu.memory_space<vmem>>, vector<1x256x256xbf16>
    %64 = vector.shape_cast %63 : vector<1x256x256xbf16> to vector<256x256xbf16>
    %cst_61 = arith.constant dense<0.000000e+00> : vector<8x256xf32>
    %65 = tpu.matmul %62, %64, %cst_61 {dimension_numbers = #tpu.dot_dimension_numbers<[1], [0], [0], [1], [0, 0, 1, 1], [], []>} : vector<8x256xbf16>, vector<256x256xbf16>, vector<8x256xf32> -> vector<8x256xf32>
    %c0_62 = arith.constant 0 : index
    %c1 = arith.constant 1 : index
    %c0_63 = arith.constant 0 : index
    %66 = vector.load %arg4[%c0_62, %c1, %c0_63] : memref<1x8x256xf32, #tpu.memory_space<vmem>>, vector<1x1x256xf32>
    %67 = vector.shape_cast %66 : vector<1x1x256xf32> to vector<1x256xf32>
    %68 = vector.broadcast %67 : vector<1x256xf32> to vector<8x256xf32>
    %69 = arith.addf %65, %68 : vector<8x256xf32>
    %cst_64 = arith.constant 0.000000e+00 : f32
    %70 = vector.broadcast %cst_64 : f32 to vector<8x256xf32>
    %71 = arith.maximumf %69, %70 : vector<8x256xf32>
    %c1_i32_65 = arith.constant 1 : i32
    %c1_i32_66 = arith.constant 1 : i32
    %c1_i32_67 = arith.constant 1 : i32
    %c0_i32_68 = arith.constant 0 : i32
    %c0_i32_69 = arith.constant 0 : i32
    %72 = tpu.memref_slice %arg7[%0, %c1_i32_65, %c0_i32_68, %c0_i32_69] : memref<2x7x256x256xbf16, #tpu.memory_space<any>> -> memref<1x1x256x256xbf16, #tpu.memory_space<any>>
    %73 = tpu.memref_squeeze %72 : memref<1x1x256x256xbf16, #tpu.memory_space<any>> -> memref<256x256xbf16, #tpu.memory_space<any>>
    %c0_i32_70 = arith.constant 0 : i32
    %c0_i32_71 = arith.constant 0 : i32
    %74 = tpu.memref_slice %arg9[%c1_i32_66, %c0_i32_70, %c0_i32_71] : memref<7x256x256xbf16, #tpu.memory_space<vmem>> -> memref<1x256x256xbf16, #tpu.memory_space<vmem>>
    %75 = tpu.memref_squeeze %74 : memref<1x256x256xbf16, #tpu.memory_space<vmem>> -> memref<256x256xbf16, #tpu.memory_space<vmem>>
    %76 = tpu.memref_slice %arg10[%c1_i32_67] : memref<7x!tpu.dma_semaphore, #tpu.memory_space<semaphore_mem>> -> memref<1x!tpu.dma_semaphore, #tpu.memory_space<semaphore_mem>>
    %77 = tpu.memref_squeeze %76 : memref<1x!tpu.dma_semaphore, #tpu.memory_space<semaphore_mem>> -> memref<!tpu.dma_semaphore, #tpu.memory_space<semaphore_mem>>
    tpu.wait_dma2 semaphore(%77 : memref<!tpu.dma_semaphore, #tpu.memory_space<semaphore_mem>>) src(%73 : memref<256x256xbf16, #tpu.memory_space<any>>) dst(%75 : memref<256x256xbf16, #tpu.memory_space<vmem>>)
    %78 = arith.truncf %71 : vector<8x256xf32> to vector<8x256xbf16>
    %c1_72 = arith.constant 1 : index
    %c0_73 = arith.constant 0 : index
    %c0_74 = arith.constant 0 : index
    %79 = vector.load %arg9[%c1_72, %c0_73, %c0_74] : memref<7x256x256xbf16, #tpu.memory_space<vmem>>, vector<1x256x256xbf16>
    %80 = vector.shape_cast %79 : vector<1x256x256xbf16> to vector<256x256xbf16>
    %cst_75 = arith.constant dense<0.000000e+00> : vector<8x256xf32>
    %81 = tpu.matmul %78, %80, %cst_75 {dimension_numbers = #tpu.dot_dimension_numbers<[1], [0], [0], [1], [0, 0, 1, 1], [], []>} : vector<8x256xbf16>, vector<256x256xbf16>, vector<8x256xf32> -> vector<8x256xf32>
    %c0_76 = arith.constant 0 : index
    %c2 = arith.constant 2 : index
    %c0_77 = arith.constant 0 : index
    %82 = vector.load %arg4[%c0_76, %c2, %c0_77] : memref<1x8x256xf32, #tpu.memory_space<vmem>>, vector<1x1x256xf32>
    %83 = vector.shape_cast %82 : vector<1x1x256xf32> to vector<1x256xf32>
    %84 = vector.broadcast %83 : vector<1x256xf32> to vector<8x256xf32>
    %85 = arith.addf %81, %84 : vector<8x256xf32>
    %cst_78 = arith.constant 0.000000e+00 : f32
    %86 = vector.broadcast %cst_78 : f32 to vector<8x256xf32>
    %87 = arith.maximumf %85, %86 : vector<8x256xf32>
    %c2_i32_79 = arith.constant 2 : i32
    %c2_i32_80 = arith.constant 2 : i32
    %c2_i32_81 = arith.constant 2 : i32
    %c0_i32_82 = arith.constant 0 : i32
    %c0_i32_83 = arith.constant 0 : i32
    %88 = tpu.memref_slice %arg7[%0, %c2_i32_79, %c0_i32_82, %c0_i32_83] : memref<2x7x256x256xbf16, #tpu.memory_space<any>> -> memref<1x1x256x256xbf16, #tpu.memory_space<any>>
    %89 = tpu.memref_squeeze %88 : memref<1x1x256x256xbf16, #tpu.memory_space<any>> -> memref<256x256xbf16, #tpu.memory_space<any>>
    %c0_i32_84 = arith.constant 0 : i32
    %c0_i32_85 = arith.constant 0 : i32
    %90 = tpu.memref_slice %arg9[%c2_i32_80, %c0_i32_84, %c0_i32_85] : memref<7x256x256xbf16, #tpu.memory_space<vmem>> -> memref<1x256x256xbf16, #tpu.memory_space<vmem>>
    %91 = tpu.memref_squeeze %90 : memref<1x256x256xbf16, #tpu.memory_space<vmem>> -> memref<256x256xbf16, #tpu.memory_space<vmem>>
    %92 = tpu.memref_slice %arg10[%c2_i32_81] : memref<7x!tpu.dma_semaphore, #tpu.memory_space<semaphore_mem>> -> memref<1x!tpu.dma_semaphore, #tpu.memory_space<semaphore_mem>>
    %93 = tpu.memref_squeeze %92 : memref<1x!tpu.dma_semaphore, #tpu.memory_space<semaphore_mem>> -> memref<!tpu.dma_semaphore, #tpu.memory_space<semaphore_mem>>
    tpu.wait_dma2 semaphore(%93 : memref<!tpu.dma_semaphore, #tpu.memory_space<semaphore_mem>>) src(%89 : memref<256x256xbf16, #tpu.memory_space<any>>) dst(%91 : memref<256x256xbf16, #tpu.memory_space<vmem>>)
    %94 = arith.truncf %87 : vector<8x256xf32> to vector<8x256xbf16>
    %c2_86 = arith.constant 2 : index
    %c0_87 = arith.constant 0 : index
    %c0_88 = arith.constant 0 : index
    %95 = vector.load %arg9[%c2_86, %c0_87, %c0_88] : memref<7x256x256xbf16, #tpu.memory_space<vmem>>, vector<1x256x256xbf16>
    %96 = vector.shape_cast %95 : vector<1x256x256xbf16> to vector<256x256xbf16>
    %cst_89 = arith.constant dense<0.000000e+00> : vector<8x256xf32>
    %97 = tpu.matmul %94, %96, %cst_89 {dimension_numbers = #tpu.dot_dimension_numbers<[1], [0], [0], [1], [0, 0, 1, 1], [], []>} : vector<8x256xbf16>, vector<256x256xbf16>, vector<8x256xf32> -> vector<8x256xf32>
    %c0_90 = arith.constant 0 : index
    %c3 = arith.constant 3 : index
    %c0_91 = arith.constant 0 : index
    %98 = vector.load %arg4[%c0_90, %c3, %c0_91] : memref<1x8x256xf32, #tpu.memory_space<vmem>>, vector<1x1x256xf32>
    %99 = vector.shape_cast %98 : vector<1x1x256xf32> to vector<1x256xf32>
    %100 = vector.broadcast %99 : vector<1x256xf32> to vector<8x256xf32>
    %101 = arith.addf %97, %100 : vector<8x256xf32>
    %cst_92 = arith.constant 0.000000e+00 : f32
    %102 = vector.broadcast %cst_92 : f32 to vector<8x256xf32>
    %103 = arith.maximumf %101, %102 : vector<8x256xf32>
    %c3_i32_93 = arith.constant 3 : i32
    %c3_i32_94 = arith.constant 3 : i32
    %c3_i32_95 = arith.constant 3 : i32
    %c0_i32_96 = arith.constant 0 : i32
    %c0_i32_97 = arith.constant 0 : i32
    %104 = tpu.memref_slice %arg7[%0, %c3_i32_93, %c0_i32_96, %c0_i32_97] : memref<2x7x256x256xbf16, #tpu.memory_space<any>> -> memref<1x1x256x256xbf16, #tpu.memory_space<any>>
    %105 = tpu.memref_squeeze %104 : memref<1x1x256x256xbf16, #tpu.memory_space<any>> -> memref<256x256xbf16, #tpu.memory_space<any>>
    %c0_i32_98 = arith.constant 0 : i32
    %c0_i32_99 = arith.constant 0 : i32
    %106 = tpu.memref_slice %arg9[%c3_i32_94, %c0_i32_98, %c0_i32_99] : memref<7x256x256xbf16, #tpu.memory_space<vmem>> -> memref<1x256x256xbf16, #tpu.memory_space<vmem>>
    %107 = tpu.memref_squeeze %106 : memref<1x256x256xbf16, #tpu.memory_space<vmem>> -> memref<256x256xbf16, #tpu.memory_space<vmem>>
    %108 = tpu.memref_slice %arg10[%c3_i32_95] : memref<7x!tpu.dma_semaphore, #tpu.memory_space<semaphore_mem>> -> memref<1x!tpu.dma_semaphore, #tpu.memory_space<semaphore_mem>>
    %109 = tpu.memref_squeeze %108 : memref<1x!tpu.dma_semaphore, #tpu.memory_space<semaphore_mem>> -> memref<!tpu.dma_semaphore, #tpu.memory_space<semaphore_mem>>
    tpu.wait_dma2 semaphore(%109 : memref<!tpu.dma_semaphore, #tpu.memory_space<semaphore_mem>>) src(%105 : memref<256x256xbf16, #tpu.memory_space<any>>) dst(%107 : memref<256x256xbf16, #tpu.memory_space<vmem>>)
    %110 = arith.truncf %103 : vector<8x256xf32> to vector<8x256xbf16>
    %c3_100 = arith.constant 3 : index
    %c0_101 = arith.constant 0 : index
    %c0_102 = arith.constant 0 : index
    %111 = vector.load %arg9[%c3_100, %c0_101, %c0_102] : memref<7x256x256xbf16, #tpu.memory_space<vmem>>, vector<1x256x256xbf16>
    %112 = vector.shape_cast %111 : vector<1x256x256xbf16> to vector<256x256xbf16>
    %cst_103 = arith.constant dense<0.000000e+00> : vector<8x256xf32>
    %113 = tpu.matmul %110, %112, %cst_103 {dimension_numbers = #tpu.dot_dimension_numbers<[1], [0], [0], [1], [0, 0, 1, 1], [], []>} : vector<8x256xbf16>, vector<256x256xbf16>, vector<8x256xf32> -> vector<8x256xf32>
    %c0_104 = arith.constant 0 : index
    %c4 = arith.constant 4 : index
    %c0_105 = arith.constant 0 : index
    %114 = vector.load %arg4[%c0_104, %c4, %c0_105] : memref<1x8x256xf32, #tpu.memory_space<vmem>>, vector<1x1x256xf32>
    %115 = vector.shape_cast %114 : vector<1x1x256xf32> to vector<1x256xf32>
    %116 = vector.broadcast %115 : vector<1x256xf32> to vector<8x256xf32>
    %117 = arith.addf %113, %116 : vector<8x256xf32>
    %cst_106 = arith.constant 0.000000e+00 : f32
    %118 = vector.broadcast %cst_106 : f32 to vector<8x256xf32>
    %119 = arith.maximumf %117, %118 : vector<8x256xf32>
    %c4_i32_107 = arith.constant 4 : i32
    %c4_i32_108 = arith.constant 4 : i32
    %c4_i32_109 = arith.constant 4 : i32
    %c0_i32_110 = arith.constant 0 : i32
    %c0_i32_111 = arith.constant 0 : i32
    %120 = tpu.memref_slice %arg7[%0, %c4_i32_107, %c0_i32_110, %c0_i32_111] : memref<2x7x256x256xbf16, #tpu.memory_space<any>> -> memref<1x1x256x256xbf16, #tpu.memory_space<any>>
    %121 = tpu.memref_squeeze %120 : memref<1x1x256x256xbf16, #tpu.memory_space<any>> -> memref<256x256xbf16, #tpu.memory_space<any>>
    %c0_i32_112 = arith.constant 0 : i32
    %c0_i32_113 = arith.constant 0 : i32
    %122 = tpu.memref_slice %arg9[%c4_i32_108, %c0_i32_112, %c0_i32_113] : memref<7x256x256xbf16, #tpu.memory_space<vmem>> -> memref<1x256x256xbf16, #tpu.memory_space<vmem>>
    %123 = tpu.memref_squeeze %122 : memref<1x256x256xbf16, #tpu.memory_space<vmem>> -> memref<256x256xbf16, #tpu.memory_space<vmem>>
    %124 = tpu.memref_slice %arg10[%c4_i32_109] : memref<7x!tpu.dma_semaphore, #tpu.memory_space<semaphore_mem>> -> memref<1x!tpu.dma_semaphore, #tpu.memory_space<semaphore_mem>>
    %125 = tpu.memref_squeeze %124 : memref<1x!tpu.dma_semaphore, #tpu.memory_space<semaphore_mem>> -> memref<!tpu.dma_semaphore, #tpu.memory_space<semaphore_mem>>
    tpu.wait_dma2 semaphore(%125 : memref<!tpu.dma_semaphore, #tpu.memory_space<semaphore_mem>>) src(%121 : memref<256x256xbf16, #tpu.memory_space<any>>) dst(%123 : memref<256x256xbf16, #tpu.memory_space<vmem>>)
    %126 = arith.truncf %119 : vector<8x256xf32> to vector<8x256xbf16>
    %c4_114 = arith.constant 4 : index
    %c0_115 = arith.constant 0 : index
    %c0_116 = arith.constant 0 : index
    %127 = vector.load %arg9[%c4_114, %c0_115, %c0_116] : memref<7x256x256xbf16, #tpu.memory_space<vmem>>, vector<1x256x256xbf16>
    %128 = vector.shape_cast %127 : vector<1x256x256xbf16> to vector<256x256xbf16>
    %cst_117 = arith.constant dense<0.000000e+00> : vector<8x256xf32>
    %129 = tpu.matmul %126, %128, %cst_117 {dimension_numbers = #tpu.dot_dimension_numbers<[1], [0], [0], [1], [0, 0, 1, 1], [], []>} : vector<8x256xbf16>, vector<256x256xbf16>, vector<8x256xf32> -> vector<8x256xf32>
    %130 = arith.addf %129, %55 : vector<8x256xf32>
    %c0_118 = arith.constant 0 : index
    %c5 = arith.constant 5 : index
    %c0_119 = arith.constant 0 : index
    %131 = vector.load %arg4[%c0_118, %c5, %c0_119] : memref<1x8x256xf32, #tpu.memory_space<vmem>>, vector<1x1x256xf32>
    %132 = vector.shape_cast %131 : vector<1x1x256xf32> to vector<1x256xf32>
    %133 = vector.broadcast %132 : vector<1x256xf32> to vector<8x256xf32>
    %134 = arith.addf %130, %133 : vector<8x256xf32>
    %cst_120 = arith.constant 0.000000e+00 : f32
    %135 = vector.broadcast %cst_120 : f32 to vector<8x256xf32>
    %136 = arith.maximumf %134, %135 : vector<8x256xf32>
    %c5_i32_121 = arith.constant 5 : i32
    %c5_i32_122 = arith.constant 5 : i32
    %c5_i32_123 = arith.constant 5 : i32
    %c0_i32_124 = arith.constant 0 : i32
    %c0_i32_125 = arith.constant 0 : i32
    %137 = tpu.memref_slice %arg7[%0, %c5_i32_121, %c0_i32_124, %c0_i32_125] : memref<2x7x256x256xbf16, #tpu.memory_space<any>> -> memref<1x1x256x256xbf16, #tpu.memory_space<any>>
    %138 = tpu.memref_squeeze %137 : memref<1x1x256x256xbf16, #tpu.memory_space<any>> -> memref<256x256xbf16, #tpu.memory_space<any>>
    %c0_i32_126 = arith.constant 0 : i32
    %c0_i32_127 = arith.constant 0 : i32
    %139 = tpu.memref_slice %arg9[%c5_i32_122, %c0_i32_126, %c0_i32_127] : memref<7x256x256xbf16, #tpu.memory_space<vmem>> -> memref<1x256x256xbf16, #tpu.memory_space<vmem>>
    %140 = tpu.memref_squeeze %139 : memref<1x256x256xbf16, #tpu.memory_space<vmem>> -> memref<256x256xbf16, #tpu.memory_space<vmem>>
    %141 = tpu.memref_slice %arg10[%c5_i32_123] : memref<7x!tpu.dma_semaphore, #tpu.memory_space<semaphore_mem>> -> memref<1x!tpu.dma_semaphore, #tpu.memory_space<semaphore_mem>>
    %142 = tpu.memref_squeeze %141 : memref<1x!tpu.dma_semaphore, #tpu.memory_space<semaphore_mem>> -> memref<!tpu.dma_semaphore, #tpu.memory_space<semaphore_mem>>
    tpu.wait_dma2 semaphore(%142 : memref<!tpu.dma_semaphore, #tpu.memory_space<semaphore_mem>>) src(%138 : memref<256x256xbf16, #tpu.memory_space<any>>) dst(%140 : memref<256x256xbf16, #tpu.memory_space<vmem>>)
    %143 = arith.truncf %136 : vector<8x256xf32> to vector<8x256xbf16>
    %c5_128 = arith.constant 5 : index
    %c0_129 = arith.constant 0 : index
    %c0_130 = arith.constant 0 : index
    %144 = vector.load %arg9[%c5_128, %c0_129, %c0_130] : memref<7x256x256xbf16, #tpu.memory_space<vmem>>, vector<1x256x256xbf16>
    %145 = vector.shape_cast %144 : vector<1x256x256xbf16> to vector<256x256xbf16>
    %cst_131 = arith.constant dense<0.000000e+00> : vector<8x256xf32>
    %146 = tpu.matmul %143, %145, %cst_131 {dimension_numbers = #tpu.dot_dimension_numbers<[1], [0], [0], [1], [0, 0, 1, 1], [], []>} : vector<8x256xbf16>, vector<256x256xbf16>, vector<8x256xf32> -> vector<8x256xf32>
    %c0_132 = arith.constant 0 : index
    %c6 = arith.constant 6 : index
    %c0_133 = arith.constant 0 : index
    %147 = vector.load %arg4[%c0_132, %c6, %c0_133] : memref<1x8x256xf32, #tpu.memory_space<vmem>>, vector<1x1x256xf32>
    %148 = vector.shape_cast %147 : vector<1x1x256xf32> to vector<1x256xf32>
    %149 = vector.broadcast %148 : vector<1x256xf32> to vector<8x256xf32>
    %150 = arith.addf %146, %149 : vector<8x256xf32>
    %cst_134 = arith.constant 0.000000e+00 : f32
    %151 = vector.broadcast %cst_134 : f32 to vector<8x256xf32>
    %152 = arith.maximumf %150, %151 : vector<8x256xf32>
    %c6_i32_135 = arith.constant 6 : i32
    %c6_i32_136 = arith.constant 6 : i32
    %c6_i32_137 = arith.constant 6 : i32
    %c0_i32_138 = arith.constant 0 : i32
    %c0_i32_139 = arith.constant 0 : i32
    %153 = tpu.memref_slice %arg7[%0, %c6_i32_135, %c0_i32_138, %c0_i32_139] : memref<2x7x256x256xbf16, #tpu.memory_space<any>> -> memref<1x1x256x256xbf16, #tpu.memory_space<any>>
    %154 = tpu.memref_squeeze %153 : memref<1x1x256x256xbf16, #tpu.memory_space<any>> -> memref<256x256xbf16, #tpu.memory_space<any>>
    %c0_i32_140 = arith.constant 0 : i32
    %c0_i32_141 = arith.constant 0 : i32
    %155 = tpu.memref_slice %arg9[%c6_i32_136, %c0_i32_140, %c0_i32_141] : memref<7x256x256xbf16, #tpu.memory_space<vmem>> -> memref<1x256x256xbf16, #tpu.memory_space<vmem>>
    %156 = tpu.memref_squeeze %155 : memref<1x256x256xbf16, #tpu.memory_space<vmem>> -> memref<256x256xbf16, #tpu.memory_space<vmem>>
    %157 = tpu.memref_slice %arg10[%c6_i32_137] : memref<7x!tpu.dma_semaphore, #tpu.memory_space<semaphore_mem>> -> memref<1x!tpu.dma_semaphore, #tpu.memory_space<semaphore_mem>>
    %158 = tpu.memref_squeeze %157 : memref<1x!tpu.dma_semaphore, #tpu.memory_space<semaphore_mem>> -> memref<!tpu.dma_semaphore, #tpu.memory_space<semaphore_mem>>
    tpu.wait_dma2 semaphore(%158 : memref<!tpu.dma_semaphore, #tpu.memory_space<semaphore_mem>>) src(%154 : memref<256x256xbf16, #tpu.memory_space<any>>) dst(%156 : memref<256x256xbf16, #tpu.memory_space<vmem>>)
    %159 = arith.truncf %152 : vector<8x256xf32> to vector<8x256xbf16>
    %c6_142 = arith.constant 6 : index
    %c0_143 = arith.constant 0 : index
    %c0_144 = arith.constant 0 : index
    %160 = vector.load %arg9[%c6_142, %c0_143, %c0_144] : memref<7x256x256xbf16, #tpu.memory_space<vmem>>, vector<1x256x256xbf16>
    %161 = vector.shape_cast %160 : vector<1x256x256xbf16> to vector<256x256xbf16>
    %cst_145 = arith.constant dense<0.000000e+00> : vector<8x256xf32>
    %162 = tpu.matmul %159, %161, %cst_145 {dimension_numbers = #tpu.dot_dimension_numbers<[1], [0], [0], [1], [0, 0, 1, 1], [], []>} : vector<8x256xbf16>, vector<256x256xbf16>, vector<8x256xf32> -> vector<8x256xf32>
    %c0_146 = arith.constant 0 : index
    %c7 = arith.constant 7 : index
    %c0_147 = arith.constant 0 : index
    %163 = vector.load %arg4[%c0_146, %c7, %c0_147] : memref<1x8x256xf32, #tpu.memory_space<vmem>>, vector<1x1x256xf32>
    %164 = vector.shape_cast %163 : vector<1x1x256xf32> to vector<1x256xf32>
    %165 = vector.broadcast %164 : vector<1x256xf32> to vector<8x256xf32>
    %166 = arith.addf %162, %165 : vector<8x256xf32>
    %cst_148 = arith.constant 0.000000e+00 : f32
    %167 = vector.broadcast %cst_148 : f32 to vector<8x256xf32>
    %168 = arith.maximumf %166, %167 : vector<8x256xf32>
    %c0_149 = arith.constant 0 : index
    %c0_150 = arith.constant 0 : index
    %c0_151 = arith.constant 0 : index
    %169 = vector.load %arg5[%c0_149, %c0_150, %c0_151] : memref<1x256x8xf32, #tpu.memory_space<vmem>>, vector<1x256x8xf32>
    %170 = vector.shape_cast %169 : vector<1x256x8xf32> to vector<256x8xf32>
    %cst_152 = arith.constant dense<0.000000e+00> : vector<8x8xf32>
    %171 = tpu.matmul %168, %170, %cst_152 {dimension_numbers = #tpu.dot_dimension_numbers<[1], [0], [0], [1], [0, 0, 1, 1], [], []>} : vector<8x256xf32>, vector<256x8xf32>, vector<8x8xf32> -> vector<8x8xf32>
    %c0_153 = arith.constant 0 : index
    %c0_154 = arith.constant 0 : index
    %c0_155 = arith.constant 0 : index
    %172 = vector.load %arg6[%c0_153, %c0_154, %c0_155] : memref<1x1x8xf32, #tpu.memory_space<vmem>>, vector<1x1x8xf32>
    %173 = vector.shape_cast %172 : vector<1x1x8xf32> to vector<1x8xf32>
    %174 = vector.broadcast %173 : vector<1x8xf32> to vector<8x8xf32>
    %175 = arith.addf %171, %174 : vector<8x8xf32>
    %c0_156 = arith.constant 0 : index
    %c0_157 = arith.constant 0 : index
    %176 = vector.load %arg8[%c0_156, %c0_157] : memref<8x8xf32, #tpu.memory_space<vmem>>, vector<8x8xf32>
    tpu.vector_store %arg8[%c0_156, %c0_157], %175 {strides = array<i32>} : memref<8x8xf32, #tpu.memory_space<vmem>>, vector<8x8xf32>,
    return
  }
  func.func @transform_0(%arg0: i32, %arg1: memref<1xi32, #tpu.memory_space<smem>>) -> (i32, i32) {
    %c0_i32 = arith.constant 0 : i32
    %c0_i32_0 = arith.constant 0 : i32
    %c0_i32_1 = arith.constant 0 : i32
    return %c0_i32, %c0_i32_0 : i32, i32
  }
  func.func @transform_1(%arg0: i32, %arg1: memref<1xi32, #tpu.memory_space<smem>>) -> (i32, i32, i32) {
    %c0 = arith.constant 0 : index
    %0 = memref.load %arg1[%c0] : memref<1xi32, #tpu.memory_space<smem>>
    %c0_i32 = arith.constant 0 : i32
    %c0_i32_0 = arith.constant 0 : i32
    %c0_i32_1 = arith.constant 0 : i32
    return %0, %c0_i32, %c0_i32_0 : i32, i32, i32
  }
  func.func @transform_2(%arg0: i32, %arg1: memref<1xi32, #tpu.memory_space<smem>>) -> (i32, i32, i32) {
    %c0 = arith.constant 0 : index
    %0 = memref.load %arg1[%c0] : memref<1xi32, #tpu.memory_space<smem>>
    %c0_i32 = arith.constant 0 : i32
    %c0_i32_0 = arith.constant 0 : i32
    %c0_i32_1 = arith.constant 0 : i32
    return %0, %c0_i32, %c0_i32_0 : i32, i32, i32
  }
  func.func @transform_3(%arg0: i32, %arg1: memref<1xi32, #tpu.memory_space<smem>>) -> (i32, i32, i32) {
    %c0 = arith.constant 0 : index
    %0 = memref.load %arg1[%c0] : memref<1xi32, #tpu.memory_space<smem>>
    %c0_i32 = arith.constant 0 : i32
    %c0_i32_0 = arith.constant 0 : i32
    %c0_i32_1 = arith.constant 0 : i32
    return %0, %c0_i32, %c0_i32_0 : i32, i32, i32
  }
  func.func @transform_4(%arg0: i32, %arg1: memref<1xi32, #tpu.memory_space<smem>>) -> (i32, i32, i32) {
    %c0 = arith.constant 0 : index
    %0 = memref.load %arg1[%c0] : memref<1xi32, #tpu.memory_space<smem>>
    %c0_i32 = arith.constant 0 : i32
    %c0_i32_0 = arith.constant 0 : i32
    %c0_i32_1 = arith.constant 0 : i32
    return %0, %c0_i32, %c0_i32_0 : i32, i32, i32
  }
  func.func @transform_6(%arg0: i32, %arg1: memref<1xi32, #tpu.memory_space<smem>>) -> (i32, i32) {
    %c0_i32 = arith.constant 0 : i32
    %c0_i32_0 = arith.constant 0 : i32
    %c0_i32_1 = arith.constant 0 : i32
    return %c0_i32, %c0_i32_0 : i32, i32
  }
}

</mosaic_0001>

<llo_original>
// kernel: seg_deep_pixel_pose_forward.1
$region0: #{seg_deep_pixel_pose_forward.1}
  #allocation0 [shape = 'u32[]', space=smem, size = 0x4, offset = 0x4, fixed_abs, tag = 'smem constant byte address 0x4 - core index']
  #allocation1 [shape = 'u32[144,128]{1,0:T(1,128)}', space=vmem, size = 0x12000, scoped, tag = 'internal scratch']
  #allocation2 [shape = 'bf16[7,256,256]{2,1,0:T(16,128)(2,1)}', space=vmem, size = 0xe0000, scoped, tag = 'scratch operand']
  #allocation3 [shape = 's32[7]{0}', space=sflag, size = 0x1c, scoped, tag = 'scratch operand']
  #allocation4 [shape = 's32[1]{0}', space=sflag, size = 0x4, scoped, tag = 'scoped memory for seg_deep_pixel_pose_forward.1']
  #allocation5 [shape = 's32[1]{0:T(128)S(6)}', space=smem, size = 0x200, scoped, tag = 'prefetched SMEM operand 0']
  #allocation11 [shape = 's32[]', space=sflag, size = 0x4, offset = 0, fixed_abs, tag = 'sflag constant byte address 0x0 - dummy sync flag']
  #allocation13 [shape = 's32[]', space=sflag, size = 0x4, offset = 0, fixed_abs, tag = 'sflag constant byte address 0x0 - dummy sync flag']
  #allocation15 [shape = 's32[]', space=sflag, size = 0x4, offset = 0, fixed_abs, tag = 'sflag constant byte address 0x0 - dummy sync flag']
  #allocation17 [shape = 's32[]', space=sflag, size = 0x4, offset = 0, fixed_abs, tag = 'sflag constant byte address 0x0 - dummy sync flag']
  #allocation19 [shape = 's32[]', space=sflag, size = 0x4, offset = 0, fixed_abs, tag = 'sflag constant byte address 0x0 - dummy sync flag']
  #allocation21 [shape = 's32[]', space=sflag, size = 0x4, offset = 0, fixed_abs, tag = 'sflag constant byte address 0x0 - dummy sync flag']
  #allocation23 [shape = 's32[]', space=sflag, size = 0x4, offset = 0, fixed_abs, tag = 'sflag constant byte address 0x0 - dummy sync flag']
  %s0 = inlined_call_operand.<no memory space> [shape: s32[1], index: 0, kind: input, shape index: {}]
  %s1 = inlined_call_operand.vmem [shape: f32[8,96], index: 1, kind: input, shape index: {}]
  %s2 = inlined_call_operand.hbm [shape: bf16[2,96,512], index: 2, kind: input, shape index: {}]
  %s3 = inlined_call_operand.hbm [shape: f32[2,8,256], index: 3, kind: input, shape index: {}]
  %s4 = inlined_call_operand.vmem [shape: f32[2,256,8], index: 4, kind: input, shape index: {}]
  %s5 = inlined_call_operand.hbm [shape: f32[2,1,8], index: 5, kind: input, shape index: {}]
  %s6 = inlined_call_operand.hbm [shape: bf16[2,7,256,256], index: 6, kind: input, shape index: {}]
  %s7 = inlined_call_operand.vmem [shape: f32[8,8], index: 7, kind: output, shape index: {}]
  %s8 = sld [smem:[#allocation0]]
  $region42: #{seg_deep_pixel_pose_forward.1} parent=0
    _
  %s10 = ssub.s32 1, %s8
  %s11 = scalar_select 0, %s10, %s8
  %12 = sst [smem:[#allocation5]] %s0
  $region1: #{seg_deep_pixel_pose_forward.1} parent=0
    #allocation6 [shape = 'u8[98304]{0}', space=vmem, size = 0x18000, scoped, tag = 'input window, operand 2, single buffered']
    #allocation7 [shape = 's32[1]{0}', space=sflag, size = 0x4, scoped, tag = 'scoped memory for seg_deep_pixel_pose_forward.1']
    #allocation8 [shape = 'u8[8192]{0}', space=vmem, size = 0x2000, scoped, tag = 'input window, operand 3, single buffered']
    #allocation9 [shape = 's32[1]{0}', space=sflag, size = 0x4, scoped, tag = 'scoped memory for seg_deep_pixel_pose_forward.1']
    #allocation10 [shape = 'u8[512]{0}', space=vmem, size = 0x400, scoped, tag = 'input window, operand 5, single buffered']
    #allocation12 [shape = 'u32[9]{0}', space=smem, size = 0x24, scoped, tag = 'DMA stride descriptor']
    #allocation14 [shape = 'u32[9]{0}', space=smem, size = 0x24, scoped, tag = 'DMA stride descriptor']
    #allocation16 [shape = 'u32[9]{0}', space=smem, size = 0x24, scoped, tag = 'DMA stride descriptor']
    #allocation18 [shape = 'u32[9]{0}', space=smem, size = 0x24, scoped, tag = 'DMA stride descriptor']
    #allocation20 [shape = 'u32[9]{0}', space=smem, size = 0x24, scoped, tag = 'DMA stride descriptor']
    #allocation22 [shape = 'u32[9]{0}', space=smem, size = 0x24, scoped, tag = 'DMA stride descriptor']
    #allocation24 [shape = 'u32[9]{0}', space=smem, size = 0x24, scoped, tag = 'DMA stride descriptor']
    %13 = vsyncpa [#allocation7], 0
    %14 = vsyncpa [#allocation9], 0
    // Predicated region
    $region2: #{seg_deep_pixel_pose_forward.1} parent=1 // pred_check
      _
    $region3: #{seg_deep_pixel_pose_forward.1} parent=1 // pred_check_branch
      %16 = sbr.rel (0) target = $region5
    $region4: #{seg_deep_pixel_pose_forward.1} parent=1 // pred_region
      _
    $region5: #{seg_deep_pixel_pose_forward.1} parent=1 // pred_fallthru
      _
    // Predicated region
    $region6: #{seg_deep_pixel_pose_forward.1} parent=1 // pred_check
      _
    $region7: #{seg_deep_pixel_pose_forward.1} parent=1 // pred_check_branch
      %18 = sbr.rel (0) target = $region9
    $region8: #{seg_deep_pixel_pose_forward.1} parent=1 // pred_region
      %s19 = sld [smem:[#allocation5]]
      %s21 = ssub.s32 3072, 3072
      %22 = vsyncadd [#allocation7], %s21
      %s23 = smul.addr %s19, 48
      %s24 = smul.addr %s23, 64
      %s25 = scalar_lea.hbm %s2, %s24
      %s26 = sshll.u32 [#allocation6], 4
      %s27 = int_to_ptr.vmem [resolvable:$true] %s26
      %32 = dma.hbm_to_vmem [thread:$0]  %s25, 3072, %s27, [#allocation7], 256, 256, 16
    $region9: #{seg_deep_pixel_pose_forward.1} parent=1 // pred_fallthru
      _
    // Predicated region
    $region10: #{seg_deep_pixel_pose_forward.1} parent=1 // pred_check
      _
    $region11: #{seg_deep_pixel_pose_forward.1} parent=1 // pred_check_branch
      %34 = sbr.rel (0) target = $region13
    $region12: #{seg_deep_pixel_pose_forward.1} parent=1 // pred_region
      %s35 = sld [smem:[#allocation5]]
      %s37 = ssub.s32 256, 256
      %38 = vsyncadd [#allocation9], %s37
      %s39 = smul.addr %s35, 2
      %s40 = smul.addr %s39, 128
      %s41 = scalar_lea.hbm %s3, %s40
      %s43 = sshll.u32 [#allocation8], 4
      %s44 = int_to_ptr.vmem [resolvable:$true] %s43
      %46 = dma.hbm_to_vmem [thread:$0]  %s41, 256, %s44, [#allocation9]
    $region13: #{seg_deep_pixel_pose_forward.1} parent=1 // pred_fallthru
      _
    // Predicated region
    $region14: #{seg_deep_pixel_pose_forward.1} parent=1 // pred_check
      _
    $region15: #{seg_deep_pixel_pose_forward.1} parent=1 // pred_check_branch
      %48 = sbr.rel (0) target = $region17
    $region16: #{seg_deep_pixel_pose_forward.1} parent=1 // pred_region
      %s49 = sld [smem:[#allocation5]]
      %p50 = scmp.lt.s32.totalorder %s49, 1
      %s51 = scalar_select %p50, %s49, 1
      %s52 = smul.addr %s51, 32
      %s53 = smul.addr %s52, 8
      %s54 = scalar_lea.vmem %s4, %s53
      %s55 = sld [smem:[#allocation5]]
    $region17: #{seg_deep_pixel_pose_forward.1} parent=1 // pred_fallthru
      _
    // Predicated region
    $region18: #{seg_deep_pixel_pose_forward.1} parent=1 // pred_check
      _
    $region19: #{seg_deep_pixel_pose_forward.1} parent=1 // pred_check_branch
      %57 = sbr.rel (0) target = $region21
    $region20: #{seg_deep_pixel_pose_forward.1} parent=1 // pred_region
      %s58 = sld [smem:[#allocation5]]
      %s60 = ssub.s32 16, 16
      %61 = vsyncadd [#allocation9], %s60
      %s62 = smul.addr %s58, 16
      %s63 = scalar_lea.hbm %s5, %s62
      %s65 = sshll.u32 [#allocation10], 4
      %s66 = int_to_ptr.vmem [resolvable:$true] %s65
      %68 = dma.hbm_to_vmem [thread:$0]  %s63, 16, %s66, [#allocation9]
    $region21: #{seg_deep_pixel_pose_forward.1} parent=1 // pred_fallthru
      _
    // Predicated region
    $region22: #{seg_deep_pixel_pose_forward.1} parent=1 // pred_check
      _
    $region23: #{seg_deep_pixel_pose_forward.1} parent=1 // pred_check_branch
      %70 = sbr.rel (0) target = $region25
    $region24: #{seg_deep_pixel_pose_forward.1} parent=1 // pred_region
      %71 = dma.done [#allocation7], 3072
    $region25: #{seg_deep_pixel_pose_forward.1} parent=1 // pred_fallthru
      _
    // Predicated region
    $region26: #{seg_deep_pixel_pose_forward.1} parent=1 // pred_check
      _
    $region27: #{seg_deep_pixel_pose_forward.1} parent=1 // pred_check_branch
      %73 = sbr.rel (0) target = $region29
    $region28: #{seg_deep_pixel_pose_forward.1} parent=1 // pred_region
      %74 = dma.done [#allocation9], 256
    $region29: #{seg_deep_pixel_pose_forward.1} parent=1 // pred_fallthru
      _
    // Predicated region
    $region30: #{seg_deep_pixel_pose_forward.1} parent=1 // pred_check
      _
    $region31: #{seg_deep_pixel_pose_forward.1} parent=1 // pred_check_branch
      %76 = sbr.rel (0) target = $region33
    $region32: #{seg_deep_pixel_pose_forward.1} parent=1 // pred_region
      %77 = dma.done [#allocation9], 16
    $region33: #{seg_deep_pixel_pose_forward.1} parent=1 // pred_fallthru
      _
    %s78 = sld [smem:[#allocation5]]
    %p79 = scmp.lt.s32.totalorder %s78, 1
    %s80 = scalar_select %p79, %s78, 1
    %s81 = smul.addr %s80, 32
    %s82 = smul.addr %s81, 8
    %s83 = scalar_lea.vmem %s4, %s82
    %s84 = sld [smem:[#allocation5]]
    %s85 = sld [smem:[#allocation5]]
    %s86 = sld [smem:[#allocation5]]
    %p87 = scmp.lt.s32.totalorder %s86, 1
    %s88 = scalar_select %p87, %s86, 1
    %s89 = smul.addr %s88, 32
    %s90 = smul.addr %s89, 8
    %s91 = scalar_lea.vmem %s4, %s90
    %s92 = sld [smem:[#allocation5]]
    %s93 = sld [smem:[#allocation5]]
    %s95 = sld [smem:[#allocation5]]
    %s96 = smul.u32 %s95, 448
    %s97 = smul.addr %s96, 64
    %s98 = scalar_lea.hbm %s6, %s97
    %s100 = sshll.u32 1, 14
    %s101 = sxor.u32 4294967295, %s100
    %s103 = sld [smem:[#allocation0]]
    %s104 = sadd.s32 2, %s103
    %s106 = sshll.u32 7, 26
    %s107 = sxor.u32 4294967295, %s106
    %s108 = sand.u32 0, %s107
    %s109 = sshll.u32 %s104, 26
    %s110 = sor.u32 %s108, %s109
    %s111 = sshll.u32 [#allocation2], 4
    %s112 = int_to_ptr.vmem [resolvable:$true] %s111
    %115 = sst [smem:[#allocation12]] 256
    %s116 = scalar_lea.smem [#allocation12], 1
    %117 = sst [smem:[%s116]] 256
    %s118 = scalar_lea.smem [#allocation12], 2
    %119 = sst [smem:[%s118]] 2
    %s120 = scalar_lea.smem [#allocation12], 3
    %121 = sst [smem:[%s120]] 64
    %s122 = scalar_lea.smem [#allocation12], 4
    %123 = sst [smem:[%s122]] 128
    %s124 = scalar_lea.smem [#allocation12], 5
    %125 = sst [smem:[%s124]] 2
    %s126 = scalar_lea.smem [#allocation12], 6
    %127 = sst [smem:[%s126]] 128
    %s128 = scalar_lea.smem [#allocation12], 7
    %129 = sst [smem:[%s128]] 64
    %s130 = scalar_lea.smem [#allocation12], 8
    %131 = sst [smem:[%s130]] 4
    %133 = dma.general %s98, 4096, %s112, [#allocation3], [#allocation11], [#allocation12], %s110, 0
    %s134 = sadd.s32 64, %s96
    %s135 = smul.addr %s134, 64
    %s136 = scalar_lea.hbm %s6, %s135
    %s137 = scalar_lea.vmem [#allocation2], 256
    %s138 = scalar_lea.sflag [#allocation3], 1
    %s140 = sshll.u32 1, 14
    %s141 = sxor.u32 4294967295, %s140
    %s143 = sadd.s32 2, %s103
    %s145 = sshll.u32 7, 26
    %s146 = sxor.u32 4294967295, %s145
    %s147 = sand.u32 0, %s146
    %s148 = sshll.u32 %s143, 26
    %s149 = sor.u32 %s147, %s148
    %s150 = sshll.u32 %s137, 4
    %s151 = int_to_ptr.vmem [resolvable:$true] %s150
    %154 = sst [smem:[#allocation14]] 256
    %s155 = scalar_lea.smem [#allocation14], 1
    %156 = sst [smem:[%s155]] 256
    %s157 = scalar_lea.smem [#allocation14], 2
    %158 = sst [smem:[%s157]] 2
    %s159 = scalar_lea.smem [#allocation14], 3
    %160 = sst [smem:[%s159]] 64
    %s161 = scalar_lea.smem [#allocation14], 4
    %162 = sst [smem:[%s161]] 128
    %s163 = scalar_lea.smem [#allocation14], 5
    %164 = sst [smem:[%s163]] 2
    %s165 = scalar_lea.smem [#allocation14], 6
    %166 = sst [smem:[%s165]] 128
    %s167 = scalar_lea.smem [#allocation14], 7
    %168 = sst [smem:[%s167]] 64
    %s169 = scalar_lea.smem [#allocation14], 8
    %170 = sst [smem:[%s169]] 4
    %172 = dma.general %s136, 4096, %s151, %s138, [#allocation13], [#allocation14], %s149, 0
    %s173 = sadd.s32 128, %s96
    %s174 = smul.addr %s173, 64
    %s175 = scalar_lea.hbm %s6, %s174
    %s176 = scalar_lea.vmem [#allocation2], 512
    %s177 = scalar_lea.sflag [#allocation3], 2
    %s179 = sshll.u32 1, 14
    %s180 = sxor.u32 4294967295, %s179
    %s182 = sadd.s32 2, %s103
    %s184 = sshll.u32 7, 26
    %s185 = sxor.u32 4294967295, %s184
    %s186 = sand.u32 0, %s185
    %s187 = sshll.u32 %s182, 26
    %s188 = sor.u32 %s186, %s187
    %s189 = sshll.u32 %s176, 4
    %s190 = int_to_ptr.vmem [resolvable:$true] %s189
    %193 = sst [smem:[#allocation16]] 256
    %s194 = scalar_lea.smem [#allocation16], 1
    %195 = sst [smem:[%s194]] 256
    %s196 = scalar_lea.smem [#allocation16], 2
    %197 = sst [smem:[%s196]] 2
    %s198 = scalar_lea.smem [#allocation16], 3
    %199 = sst [smem:[%s198]] 64
    %s200 = scalar_lea.smem [#allocation16], 4
    %201 = sst [smem:[%s200]] 128
    %s202 = scalar_lea.smem [#allocation16], 5
    %203 = sst [smem:[%s202]] 2
    %s204 = scalar_lea.smem [#allocation16], 6
    %205 = sst [smem:[%s204]] 128
    %s206 = scalar_lea.smem [#allocation16], 7
    %207 = sst [smem:[%s206]] 64
    %s208 = scalar_lea.smem [#allocation16], 8
    %209 = sst [smem:[%s208]] 4
    %211 = dma.general %s175, 4096, %s190, %s177, [#allocation15], [#allocation16], %s188, 0
    %s212 = sadd.s32 192, %s96
    %s213 = smul.addr %s212, 64
    %s214 = scalar_lea.hbm %s6, %s213
    %s215 = scalar_lea.vmem [#allocation2], 768
    %s216 = scalar_lea.sflag [#allocation3], 3
    %s218 = sshll.u32 1, 14
    %s219 = sxor.u32 4294967295, %s218
    %s221 = sadd.s32 2, %s103
    %s223 = sshll.u32 7, 26
    %s224 = sxor.u32 4294967295, %s223
    %s225 = sand.u32 0, %s224
    %s226 = sshll.u32 %s221, 26
    %s227 = sor.u32 %s225, %s226
    %s228 = sshll.u32 %s215, 4
    %s229 = int_to_ptr.vmem [resolvable:$true] %s228
    %232 = sst [smem:[#allocation18]] 256
    %s233 = scalar_lea.smem [#allocation18], 1
    %234 = sst [smem:[%s233]] 256
    %s235 = scalar_lea.smem [#allocation18], 2
    %236 = sst [smem:[%s235]] 2
    %s237 = scalar_lea.smem [#allocation18], 3
    %238 = sst [smem:[%s237]] 64
    %s239 = scalar_lea.smem [#allocation18], 4
    %240 = sst [smem:[%s239]] 128
    %s241 = scalar_lea.smem [#allocation18], 5
    %242 = sst [smem:[%s241]] 2
    %s243 = scalar_lea.smem [#allocation18], 6
    %244 = sst [smem:[%s243]] 128
    %s245 = scalar_lea.smem [#allocation18], 7
    %246 = sst [smem:[%s245]] 64
    %s247 = scalar_lea.smem [#allocation18], 8
    %248 = sst [smem:[%s247]] 4
    %250 = dma.general %s214, 4096, %s229, %s216, [#allocation17], [#allocation18], %s227, 0
    %s251 = sadd.s32 256, %s96
    %s252 = smul.addr %s251, 64
    %s253 = scalar_lea.hbm %s6, %s252
    %s254 = scalar_lea.vmem [#allocation2], 1024
    %s255 = scalar_lea.sflag [#allocation3], 4
    %s257 = sshll.u32 1, 14
    %s258 = sxor.u32 4294967295, %s257
    %s260 = sadd.s32 2, %s103
    %s262 = sshll.u32 7, 26
    %s263 = sxor.u32 4294967295, %s262
    %s264 = sand.u32 0, %s263
    %s265 = sshll.u32 %s260, 26
    %s266 = sor.u32 %s264, %s265
    %s267 = sshll.u32 %s254, 4
    %s268 = int_to_ptr.vmem [resolvable:$true] %s267
    %271 = sst [smem:[#allocation20]] 256
    %s272 = scalar_lea.smem [#allocation20], 1
    %273 = sst [smem:[%s272]] 256
    %s274 = scalar_lea.smem [#allocation20], 2
    %275 = sst [smem:[%s274]] 2
    %s276 = scalar_lea.smem [#allocation20], 3
    %277 = sst [smem:[%s276]] 64
    %s278 = scalar_lea.smem [#allocation20], 4
    %279 = sst [smem:[%s278]] 128
    %s280 = scalar_lea.smem [#allocation20], 5
    %281 = sst [smem:[%s280]] 2
    %s282 = scalar_lea.smem [#allocation20], 6
    %283 = sst [smem:[%s282]] 128
    %s284 = scalar_lea.smem [#allocation20], 7
    %285 = sst [smem:[%s284]] 64
    %s286 = scalar_lea.smem [#allocation20], 8
    %287 = sst [smem:[%s286]] 4
    %289 = dma.general %s253, 4096, %s268, %s255, [#allocation19], [#allocation20], %s266, 0
    %s290 = sadd.s32 320, %s96
    %s291 = smul.addr %s290, 64
    %s292 = scalar_lea.hbm %s6, %s291
    %s293 = scalar_lea.vmem [#allocation2], 1280
    %s294 = scalar_lea.sflag [#allocation3], 5
    %s296 = sshll.u32 1, 14
    %s297 = sxor.u32 4294967295, %s296
    %s299 = sadd.s32 2, %s103
    %s301 = sshll.u32 7, 26
    %s302 = sxor.u32 4294967295, %s301
    %s303 = sand.u32 0, %s302
    %s304 = sshll.u32 %s299, 26
    %s305 = sor.u32 %s303, %s304
    %s306 = sshll.u32 %s293, 4
    %s307 = int_to_ptr.vmem [resolvable:$true] %s306
    %310 = sst [smem:[#allocation22]] 256
    %s311 = scalar_lea.smem [#allocation22], 1
    %312 = sst [smem:[%s311]] 256
    %s313 = scalar_lea.smem [#allocation22], 2
    %314 = sst [smem:[%s313]] 2
    %s315 = scalar_lea.smem [#allocation22], 3
    %316 = sst [smem:[%s315]] 64
    %s317 = scalar_lea.smem [#allocation22], 4
    %318 = sst [smem:[%s317]] 128
    %s319 = scalar_lea.smem [#allocation22], 5
    %320 = sst [smem:[%s319]] 2
    %s321 = scalar_lea.smem [#allocation22], 6
    %322 = sst [smem:[%s321]] 128
    %s323 = scalar_lea.smem [#allocation22], 7
    %324 = sst [smem:[%s323]] 64
    %s325 = scalar_lea.smem [#allocation22], 8
    %326 = sst [smem:[%s325]] 4
    %328 = dma.general %s292, 4096, %s307, %s294, [#allocation21], [#allocation22], %s305, 0
    %s329 = sadd.s32 384, %s96
    %s330 = smul.addr %s329, 64
    %s331 = scalar_lea.hbm %s6, %s330
    %s332 = scalar_lea.vmem [#allocation2], 1536
    %s333 = scalar_lea.sflag [#allocation3], 6
    %s335 = sshll.u32 1, 14
    %s336 = sxor.u32 4294967295, %s335
    %s338 = sadd.s32 2, %s103
    %s340 = sshll.u32 7, 26
    %s341 = sxor.u32 4294967295, %s340
    %s342 = sand.u32 0, %s341
    %s343 = sshll.u32 %s338, 26
    %s344 = sor.u32 %s342, %s343
    %s345 = sshll.u32 %s332, 4
    %s346 = int_to_ptr.vmem [resolvable:$true] %s345
    %349 = sst [smem:[#allocation24]] 256
    %s350 = scalar_lea.smem [#allocation24], 1
    %351 = sst [smem:[%s350]] 256
    %s352 = scalar_lea.smem [#allocation24], 2
    %353 = sst [smem:[%s352]] 2
    %s354 = scalar_lea.smem [#allocation24], 3
    %355 = sst [smem:[%s354]] 64
    %s356 = scalar_lea.smem [#allocation24], 4
    %357 = sst [smem:[%s356]] 128
    %s358 = scalar_lea.smem [#allocation24], 5
    %359 = sst [smem:[%s358]] 2
    %s360 = scalar_lea.smem [#allocation24], 6
    %361 = sst [smem:[%s360]] 128
    %s362 = scalar_lea.smem [#allocation24], 7
    %363 = sst [smem:[%s362]] 64
    %s364 = scalar_lea.smem [#allocation24], 8
    %365 = sst [smem:[%s364]] 4
    %367 = dma.general %s331, 4096, %s346, %s333, [#allocation23], [#allocation24], %s344, 0
    %v368 = vld [vmem:[%s1] sm:$0xff]
    %v369 = vpack.c.bf16 %v368, %v368
    %v370 = vld [vmem:[#allocation6] sm:$0xff]
    %v371 = vld [vmem:[#allocation6 + $0x8] sm:$0xff]
    %v372 = vld [vmem:[#allocation6 + $0x10] sm:$0xff]
    %v373 = vld [vmem:[#allocation6 + $0x18] sm:$0xff]
    %v374 = vld [vmem:[#allocation6 + $0x20] sm:$0xff]
    %v375 = vld [vmem:[#allocation6 + $0x28] sm:$0xff]
    %v376 = vld [vmem:[#allocation6 + $0x30] sm:$0xff]
    %v377 = vld [vmem:[#allocation6 + $0x38] sm:$0xff]
    %v378 = vld [vmem:[#allocation6 + $0x40] sm:$0xff]
    %v379 = vld [vmem:[#allocation6 + $0x48] sm:$0xff]
    %v380 = vld [vmem:[#allocation6 + $0x50] sm:$0xff]
    %v381 = vld [vmem:[#allocation6 + $0x58] sm:$0xff]
    %v382 = vld [vmem:[#allocation6 + $0x60] sm:$0xff]
    %v383 = vld [vmem:[#allocation6 + $0x68] sm:$0xff]
    %v384 = vld [vmem:[#allocation6 + $0x70] sm:$0xff]
    %v385 = vld [vmem:[#allocation6 + $0x78] sm:$0xff]
    %v386 = vld [vmem:[#allocation6 + $0x80] sm:$0xff]
    %v387 = vld [vmem:[#allocation6 + $0x88] sm:$0xff]
    %v388 = vld [vmem:[#allocation6 + $0x90] sm:$0xff]
    %v389 = vld [vmem:[#allocation6 + $0x98] sm:$0xff]
    %v390 = vld [vmem:[#allocation6 + $0xa0] sm:$0xff]
    %v391 = vld [vmem:[#allocation6 + $0xa8] sm:$0xff]
    %v392 = vld [vmem:[#allocation6 + $0xb0] sm:$0xff]
    %v393 = vld [vmem:[#allocation6 + $0xb8] sm:$0xff]
    %v418 = vunpack.c.l.b16 %v370
    %v419 = vunpack.c.h.b16 %v370
    %v420 = vunpack.c.l.b16 %v371
    %v421 = vunpack.c.h.b16 %v371
    %v422 = vunpack.c.l.b16 %v372
    %v423 = vunpack.c.h.b16 %v372
    %v424 = vunpack.c.l.b16 %v373
    %v425 = vunpack.c.h.b16 %v373
    %v426 = vunpack.c.l.b16 %v374
    %v427 = vunpack.c.h.b16 %v374
    %v428 = vunpack.c.l.b16 %v375
    %v429 = vunpack.c.h.b16 %v375
    %v430 = vunpack.c.l.b16 %v376
    %v431 = vunpack.c.h.b16 %v376
    %v432 = vunpack.c.l.b16 %v377
    %v433 = vunpack.c.h.b16 %v377
    %v434 = vunpack.c.l.b16 %v378
    %v435 = vunpack.c.h.b16 %v378
    %v436 = vunpack.c.l.b16 %v379
    %v437 = vunpack.c.h.b16 %v379
    %v438 = vunpack.c.l.b16 %v380
    %v439 = vunpack.c.h.b16 %v380
    %v440 = vunpack.c.l.b16 %v381
    %v441 = vunpack.c.h.b16 %v381
    %v442 = vunpack.c.l.b16 %v382
    %v443 = vunpack.c.h.b16 %v382
    %v444 = vunpack.c.l.b16 %v383
    %v445 = vunpack.c.h.b16 %v383
    %v446 = vunpack.c.l.b16 %v384
    %v447 = vunpack.c.h.b16 %v384
    %v448 = vunpack.c.l.b16 %v385
    %v449 = vunpack.c.h.b16 %v385
    %v450 = vunpack.c.l.b16 %v386
    %v451 = vunpack.c.h.b16 %v386
    %v452 = vunpack.c.l.b16 %v387
    %v453 = vunpack.c.h.b16 %v387
    %v454 = vunpack.c.l.b16 %v388
    %v455 = vunpack.c.h.b16 %v388
    %v456 = vunpack.c.l.b16 %v389
    %v457 = vunpack.c.h.b16 %v389
    %v458 = vunpack.c.l.b16 %v390
    %v459 = vunpack.c.h.b16 %v390
    %v460 = vunpack.c.l.b16 %v391
    %v461 = vunpack.c.h.b16 %v391
    %v462 = vunpack.c.l.b16 %v392
    %v463 = vunpack.c.h.b16 %v392
    %v464 = vunpack.c.l.b16 %v393
    %v465 = vunpack.c.h.b16 %v393
    %v466 = vpack.c.b16 %v422, %v418
    %v467 = vpack.c.b16 %v423, %v419
    %v468 = vpack.c.b16 %v424, %v420
    %v469 = vpack.c.b16 %v425, %v421
    %v470 = vpack.c.b16 %v430, %v426
    %v471 = vpack.c.b16 %v431, %v427
    %v472 = vpack.c.b16 %v432, %v428
    %v473 = vpack.c.b16 %v433, %v429
    %v474 = vpack.c.b16 %v438, %v434
    %v475 = vpack.c.b16 %v439, %v435
    %v476 = vpack.c.b16 %v440, %v436
    %v477 = vpack.c.b16 %v441, %v437
    %v478 = vpack.c.b16 %v446, %v442
    %v479 = vpack.c.b16 %v447, %v443
    %v480 = vpack.c.b16 %v448, %v444
    %v481 = vpack.c.b16 %v449, %v445
    %v482 = vpack.c.b16 %v454, %v450
    %v483 = vpack.c.b16 %v455, %v451
    %v484 = vpack.c.b16 %v456, %v452
    %v485 = vpack.c.b16 %v457, %v453
    %v486 = vpack.c.b16 %v462, %v458
    %v487 = vpack.c.b16 %v463, %v459
    %v488 = vpack.c.b16 %v464, %v460
    %v489 = vpack.c.b16 %v465, %v461
    %vm514 = vcmask 785408
    %v516 = vsel %vm514, %v369, 0
    %518 = vmatprep.subr.bf16.mxu0 %v467
    %519 = vmatpush1.bf16.msra.mxu0 %v466
    %520 = vmatprep.subr.bf16.mxu0 %v471
    %521 = vmatpush1.bf16.msra.mxu0 %v470
    %522 = vmatprep.subr.bf16.mxu0 %v475
    %523 = vmatpush1.bf16.msra.mxu0 %v474
    %524 = vmatprep.subr.bf16.mxu0 %v479
    %525 = vmatpush1.bf16.msra.mxu0 %v478
    %526 = vmatprep.subr.bf16.mxu0 %v483
    %527 = vmatpush1.bf16.msra.mxu0 %v482
    %528 = vmatprep.subr.bf16.mxu0 %v487
    %529 = vmatpush1.bf16.msra.mxu0 %v486
    %530 = vmatprep.subr.bf16.mxu0 0
    %531 = vmatpush1.bf16.msra.mxu0 0
    %532 = vmatprep.subr.bf16.mxu0 0
    %533 = vmatpush1.bf16.msra.mxu0 0
    %534 = vmatprep.subr.bf16.mxu0 0
    %535 = vmatpush1.bf16.msra.mxu0 0
    %536 = vmatprep.subr.bf16.mxu0 0
    %537 = vmatpush1.bf16.msra.mxu0 0
    %538 = vmatprep.subr.bf16.mxu0 0
    %539 = vmatpush1.bf16.msra.mxu0 0
    %540 = vmatprep.subr.bf16.mxu0 0
    %541 = vmatpush1.bf16.msra.mxu0 0
    %542 = vmatprep.subr.bf16.mxu0 0
    %543 = vmatpush1.bf16.msra.mxu0 0
    %544 = vmatprep.subr.bf16.mxu0 0
    %545 = vmatpush1.bf16.msra.mxu0 0
    %546 = vmatprep.subr.bf16.mxu0 0
    %547 = vmatpush1.bf16.msra.mxu0 0
    %548 = vmatprep.subr.bf16.mxu0 0
    %549 = vmatpush1.bf16.msra.mxu0 0
    %550 = vmatprep.mubr.bf16.mxu0 0
    %551 = vmatmul.mubr.bf16.gmra.mrb[0].mxu0 %v516
    %v552 = vpop.f32.mrb[0].mxu0
    %v553 = vadd.f32 0.0, %v552
    %v554 = vpop.f32.mrb[0].mxu0
    %v555 = vadd.f32 0.0, %v554
    %v556 = vpop.f32.mrb[0].mxu0
    %v557 = vpop.f32.mrb[0].mxu0
    %558 = vdwg.mxu0
    %559 = vmatprep.subr.bf16.mxu0 %v469
    %560 = vmatpush1.bf16.msra.mxu0 %v468
    %561 = vmatprep.subr.bf16.mxu0 %v473
    %562 = vmatpush1.bf16.msra.mxu0 %v472
    %563 = vmatprep.subr.bf16.mxu0 %v477
    %564 = vmatpush1.bf16.msra.mxu0 %v476
    %565 = vmatprep.subr.bf16.mxu0 %v481
    %566 = vmatpush1.bf16.msra.mxu0 %v480
    %567 = vmatprep.subr.bf16.mxu0 %v485
    %568 = vmatpush1.bf16.msra.mxu0 %v484
    %569 = vmatprep.subr.bf16.mxu0 %v489
    %570 = vmatpush1.bf16.msra.mxu0 %v488
    %571 = vmatprep.subr.bf16.mxu0 0
    %572 = vmatpush1.bf16.msra.mxu0 0
    %573 = vmatprep.subr.bf16.mxu0 0
    %574 = vmatpush1.bf16.msra.mxu0 0
    %575 = vmatprep.subr.bf16.mxu0 0
    %576 = vmatpush1.bf16.msra.mxu0 0
    %577 = vmatprep.subr.bf16.mxu0 0
    %578 = vmatpush1.bf16.msra.mxu0 0
    %579 = vmatprep.subr.bf16.mxu0 0
    %580 = vmatpush1.bf16.msra.mxu0 0
    %581 = vmatprep.subr.bf16.mxu0 0
    %582 = vmatpush1.bf16.msra.mxu0 0
    %583 = vmatprep.subr.bf16.mxu0 0
    %584 = vmatpush1.bf16.msra.mxu0 0
    %585 = vmatprep.subr.bf16.mxu0 0
    %586 = vmatpush1.bf16.msra.mxu0 0
    %587 = vmatprep.subr.bf16.mxu0 0
    %588 = vmatpush1.bf16.msra.mxu0 0
    %589 = vmatprep.subr.bf16.mxu0 0
    %590 = vmatpush1.bf16.msra.mxu0 0
    %591 = vmatprep.mubr.bf16.mxu0 0
    %592 = vmatmul.mubr.bf16.gmra.mrb[0].mxu0 %v516
    %v593 = vpop.f32.mrb[0].mxu0
    %v594 = vadd.f32 0.0, %v593
    %v595 = vpop.f32.mrb[0].mxu0
    %v596 = vadd.f32 0.0, %v595
    %v597 = vpop.f32.mrb[0].mxu0
    %v598 = vpop.f32.mrb[0].mxu0
    %599 = vdwg.mxu0
    %v600 = vld [vmem:[#allocation8] ss:$8 sm:$0x3]
    %v602 = vlaneseq
    %v603 = vshrl.u32 %v602, 7
    %v604 = vsub.s32 0, %v603
    %v605 = vrot.slane %v600, %v604
    %v606 = vlaneseq
    %v607 = vshrl.u32 %v606, 7
    %v608 = vsub.s32 1, %v607
    %v609 = vrot.slane %v600, %v608
    %v612 = vadd.f32 %v553, %v605
    %v613 = vadd.f32 %v555, %v609
    %v614 = vmax.f32 %v612, 0.0
    %v615 = vmax.f32 %v613, 0.0
    %s616 = smul.u32 4, 32
    %s617 = smul.u32 %s616, 2
    %s618 = sshll.u32 %s617, 4
    %619 = dma.done [#allocation3], %s618
    %v620 = vpack.c.bf16 %v614, %v614
    %v621 = vpack.c.bf16 %v615, %v615
    %v622 = vld [vmem:[#allocation2] sm:$0xff]
    %v623 = vld [vmem:[#allocation2 + $0x8] sm:$0xff]
    %v624 = vld [vmem:[#allocation2 + $0x10] sm:$0xff]
    %v625 = vld [vmem:[#allocation2 + $0x18] sm:$0xff]
    %v626 = vld [vmem:[#allocation2 + $0x20] sm:$0xff]
    %v627 = vld [vmem:[#allocation2 + $0x28] sm:$0xff]
    %v628 = vld [vmem:[#allocation2 + $0x30] sm:$0xff]
    %v629 = vld [vmem:[#allocation2 + $0x38] sm:$0xff]
    %v630 = vld [vmem:[#allocation2 + $0x40] sm:$0xff]
    %v631 = vld [vmem:[#allocation2 + $0x48] sm:$0xff]
    %v632 = vld [vmem:[#allocation2 + $0x50] sm:$0xff]
    %v633 = vld [vmem:[#allocation2 + $0x58] sm:$0xff]
    %v634 = vld [vmem:[#allocation2 + $0x60] sm:$0xff]
    %v635 = vld [vmem:[#allocation2 + $0x68] sm:$0xff]
    %v636 = vld [vmem:[#allocation2 + $0x70] sm:$0xff]
    %v637 = vld [vmem:[#allocation2 + $0x78] sm:$0xff]
    %v638 = vld [vmem:[#allocation2 + $0x80] sm:$0xff]
    %v639 = vld [vmem:[#allocation2 + $0x88] sm:$0xff]
    %v640 = vld [vmem:[#allocation2 + $0x90] sm:$0xff]
    %v641 = vld [vmem:[#allocation2 + $0x98] sm:$0xff]
    %v642 = vld [vmem:[#allocation2 + $0xa0] sm:$0xff]
    %v643 = vld [vmem:[#allocation2 + $0xa8] sm:$0xff]
    %v644 = vld [vmem:[#allocation2 + $0xb0] sm:$0xff]
    %v645 = vld [vmem:[#allocation2 + $0xb8] sm:$0xff]
    %v646 = vld [vmem:[#allocation2 + $0xc0] sm:$0xff]
    %v647 = vld [vmem:[#allocation2 + $0xc8] sm:$0xff]
    %v648 = vld [vmem:[#allocation2 + $0xd0] sm:$0xff]
    %v649 = vld [vmem:[#allocation2 + $0xd8] sm:$0xff]
    %v650 = vld [vmem:[#allocation2 + $0xe0] sm:$0xff]
    %v651 = vld [vmem:[#allocation2 + $0xe8] sm:$0xff]
    %v652 = vld [vmem:[#allocation2 + $0xf0] sm:$0xff]
    %v653 = vld [vmem:[#allocation2 + $0xf8] sm:$0xff]
    %s654 = scalar_lea.vmem [#allocation8], 1
    %v655 = vld [vmem:[%s654] ss:$8 sm:$0x3]
    %v657 = vlaneseq
    %v658 = vshrl.u32 %v657, 7
    %v659 = vsub.s32 0, %v658
    %v660 = vrot.slane %v655, %v659
    %v661 = vlaneseq
    %v662 = vshrl.u32 %v661, 7
    %v663 = vsub.s32 1, %v662
    %v664 = vrot.slane %v655, %v663
    %667 = vmatprep.subr.bf16.mxu0 %v623
    %668 = vmatpush1.bf16.msra.mxu0 %v622
    %669 = vmatprep.subr.bf16.mxu0 %v625
    %670 = vmatpush1.bf16.msra.mxu0 %v624
    %671 = vmatprep.subr.bf16.mxu0 %v627
    %672 = vmatpush1.bf16.msra.mxu0 %v626
    %673 = vmatprep.subr.bf16.mxu0 %v629
    %674 = vmatpush1.bf16.msra.mxu0 %v628
    %675 = vmatprep.subr.bf16.mxu0 %v631
    %676 = vmatpush1.bf16.msra.mxu0 %v630
    %677 = vmatprep.subr.bf16.mxu0 %v633
    %678 = vmatpush1.bf16.msra.mxu0 %v632
    %679 = vmatprep.subr.bf16.mxu0 %v635
    %680 = vmatpush1.bf16.msra.mxu0 %v634
    %681 = vmatprep.subr.bf16.mxu0 %v637
    %682 = vmatpush1.bf16.msra.mxu0 %v636
    %683 = vmatprep.subr.bf16.mxu0 %v639
    %684 = vmatpush1.bf16.msra.mxu0 %v638
    %685 = vmatprep.subr.bf16.mxu0 %v641
    %686 = vmatpush1.bf16.msra.mxu0 %v640
    %687 = vmatprep.subr.bf16.mxu0 %v643
    %688 = vmatpush1.bf16.msra.mxu0 %v642
    %689 = vmatprep.subr.bf16.mxu0 %v645
    %690 = vmatpush1.bf16.msra.mxu0 %v644
    %691 = vmatprep.subr.bf16.mxu0 %v647
    %692 = vmatpush1.bf16.msra.mxu0 %v646
    %693 = vmatprep.subr.bf16.mxu0 %v649
    %694 = vmatpush1.bf16.msra.mxu0 %v648
    %695 = vmatprep.subr.bf16.mxu0 %v651
    %696 = vmatpush1.bf16.msra.mxu0 %v650
    %697 = vmatprep.subr.bf16.mxu0 %v653
    %698 = vmatpush1.bf16.msra.mxu0 %v652
    %699 = vmatprep.mubr.bf16.mxu0 %v621
    %700 = vmatmul.mubr.bf16.gmra.mrb[0].mxu0 %v620
    %v701 = vpop.f32.mrb[0].mxu0
    %v702 = vadd.f32 %v660, %v701
    %v703 = vpop.f32.mrb[0].mxu0
    %v704 = vadd.f32 %v664, %v703
    %v705 = vpop.f32.mrb[0].mxu0
    %v706 = vpop.f32.mrb[0].mxu0
    %707 = vdwg.mxu0
    %v708 = vmax.f32 %v702, 0.0
    %v709 = vmax.f32 %v704, 0.0
    %s710 = sshll.u32 %s617, 4
    %711 = dma.done %s138, %s710
    %v712 = vpack.c.bf16 %v708, %v708
    %v713 = vpack.c.bf16 %v709, %v709
    %v714 = vld [vmem:[%s137] sm:$0xff]
    %v715 = vld [vmem:[%s137 + $0x8] sm:$0xff]
    %v716 = vld [vmem:[%s137 + $0x10] sm:$0xff]
    %v717 = vld [vmem:[%s137 + $0x18] sm:$0xff]
    %v718 = vld [vmem:[%s137 + $0x20] sm:$0xff]
    %v719 = vld [vmem:[%s137 + $0x28] sm:$0xff]
    %v720 = vld [vmem:[%s137 + $0x30] sm:$0xff]
    %v721 = vld [vmem:[%s137 + $0x38] sm:$0xff]
    %v722 = vld [vmem:[%s137 + $0x40] sm:$0xff]
    %v723 = vld [vmem:[%s137 + $0x48] sm:$0xff]
    %v724 = vld [vmem:[%s137 + $0x50] sm:$0xff]
    %v725 = vld [vmem:[%s137 + $0x58] sm:$0xff]
    %v726 = vld [vmem:[%s137 + $0x60] sm:$0xff]
    %v727 = vld [vmem:[%s137 + $0x68] sm:$0xff]
    %v728 = vld [vmem:[%s137 + $0x70] sm:$0xff]
    %v729 = vld [vmem:[%s137 + $0x78] sm:$0xff]
    %v730 = vld [vmem:[%s137 + $0x80] sm:$0xff]
    %v731 = vld [vmem:[%s137 + $0x88] sm:$0xff]
    %v732 = vld [vmem:[%s137 + $0x90] sm:$0xff]
    %v733 = vld [vmem:[%s137 + $0x98] sm:$0xff]
    %v734 = vld [vmem:[%s137 + $0xa0] sm:$0xff]
    %v735 = vld [vmem:[%s137 + $0xa8] sm:$0xff]
    %v736 = vld [vmem:[%s137 + $0xb0] sm:$0xff]
    %v737 = vld [vmem:[%s137 + $0xb8] sm:$0xff]
    %v738 = vld [vmem:[%s137 + $0xc0] sm:$0xff]
    %v739 = vld [vmem:[%s137 + $0xc8] sm:$0xff]
    %v740 = vld [vmem:[%s137 + $0xd0] sm:$0xff]
    %v741 = vld [vmem:[%s137 + $0xd8] sm:$0xff]
    %v742 = vld [vmem:[%s137 + $0xe0] sm:$0xff]
    %v743 = vld [vmem:[%s137 + $0xe8] sm:$0xff]
    %v744 = vld [vmem:[%s137 + $0xf0] sm:$0xff]
    %v745 = vld [vmem:[%s137 + $0xf8] sm:$0xff]
    %s746 = scalar_lea.vmem [#allocation8], 2
    %v747 = vld [vmem:[%s746] ss:$8 sm:$0x3]
    %v749 = vlaneseq
    %v750 = vshrl.u32 %v749, 7
    %v751 = vsub.s32 0, %v750
    %v752 = vrot.slane %v747, %v751
    %v753 = vlaneseq
    %v754 = vshrl.u32 %v753, 7
    %v755 = vsub.s32 1, %v754
    %v756 = vrot.slane %v747, %v755
    %759 = vmatprep.subr.bf16.mxu0 %v715
    %760 = vmatpush1.bf16.msra.mxu0 %v714
    %761 = vmatprep.subr.bf16.mxu0 %v717
    %762 = vmatpush1.bf16.msra.mxu0 %v716
    %763 = vmatprep.subr.bf16.mxu0 %v719
    %764 = vmatpush1.bf16.msra.mxu0 %v718
    %765 = vmatprep.subr.bf16.mxu0 %v721
    %766 = vmatpush1.bf16.msra.mxu0 %v720
    %767 = vmatprep.subr.bf16.mxu0 %v723
    %768 = vmatpush1.bf16.msra.mxu0 %v722
    %769 = vmatprep.subr.bf16.mxu0 %v725
    %770 = vmatpush1.bf16.msra.mxu0 %v724
    %771 = vmatprep.subr.bf16.mxu0 %v727
    %772 = vmatpush1.bf16.msra.mxu0 %v726
    %773 = vmatprep.subr.bf16.mxu0 %v729
    %774 = vmatpush1.bf16.msra.mxu0 %v728
    %775 = vmatprep.subr.bf16.mxu0 %v731
    %776 = vmatpush1.bf16.msra.mxu0 %v730
    %777 = vmatprep.subr.bf16.mxu0 %v733
    %778 = vmatpush1.bf16.msra.mxu0 %v732
    %779 = vmatprep.subr.bf16.mxu0 %v735
    %780 = vmatpush1.bf16.msra.mxu0 %v734
    %781 = vmatprep.subr.bf16.mxu0 %v737
    %782 = vmatpush1.bf16.msra.mxu0 %v736
    %783 = vmatprep.subr.bf16.mxu0 %v739
    %784 = vmatpush1.bf16.msra.mxu0 %v738
    %785 = vmatprep.subr.bf16.mxu0 %v741
    %786 = vmatpush1.bf16.msra.mxu0 %v740
    %787 = vmatprep.subr.bf16.mxu0 %v743
    %788 = vmatpush1.bf16.msra.mxu0 %v742
    %789 = vmatprep.subr.bf16.mxu0 %v745
    %790 = vmatpush1.bf16.msra.mxu0 %v744
    %791 = vmatprep.mubr.bf16.mxu0 %v713
    %792 = vmatmul.mubr.bf16.gmra.mrb[0].mxu0 %v712
    %v793 = vpop.f32.mrb[0].mxu0
    %v794 = vadd.f32 %v752, %v793
    %v795 = vpop.f32.mrb[0].mxu0
    %v796 = vadd.f32 %v756, %v795
    %v797 = vpop.f32.mrb[0].mxu0
    %v798 = vpop.f32.mrb[0].mxu0
    %799 = vdwg.mxu0
    %v800 = vmax.f32 %v794, 0.0
    %v801 = vmax.f32 %v796, 0.0
    %s802 = sshll.u32 %s617, 4
    %803 = dma.done %s177, %s802
    %v804 = vpack.c.bf16 %v800, %v800
    %v805 = vpack.c.bf16 %v801, %v801
    %v806 = vld [vmem:[%s176] sm:$0xff]
    %v807 = vld [vmem:[%s176 + $0x8] sm:$0xff]
    %v808 = vld [vmem:[%s176 + $0x10] sm:$0xff]
    %v809 = vld [vmem:[%s176 + $0x18] sm:$0xff]
    %v810 = vld [vmem:[%s176 + $0x20] sm:$0xff]
    %v811 = vld [vmem:[%s176 + $0x28] sm:$0xff]
    %v812 = vld [vmem:[%s176 + $0x30] sm:$0xff]
    %v813 = vld [vmem:[%s176 + $0x38] sm:$0xff]
    %v814 = vld [vmem:[%s176 + $0x40] sm:$0xff]
    %v815 = vld [vmem:[%s176 + $0x48] sm:$0xff]
    %v816 = vld [vmem:[%s176 + $0x50] sm:$0xff]
    %v817 = vld [vmem:[%s176 + $0x58] sm:$0xff]
    %v818 = vld [vmem:[%s176 + $0x60] sm:$0xff]
    %v819 = vld [vmem:[%s176 + $0x68] sm:$0xff]
    %v820 = vld [vmem:[%s176 + $0x70] sm:$0xff]
    %v821 = vld [vmem:[%s176 + $0x78] sm:$0xff]
    %v822 = vld [vmem:[%s176 + $0x80] sm:$0xff]
    %v823 = vld [vmem:[%s176 + $0x88] sm:$0xff]
    %v824 = vld [vmem:[%s176 + $0x90] sm:$0xff]
    %v825 = vld [vmem:[%s176 + $0x98] sm:$0xff]
    %v826 = vld [vmem:[%s176 + $0xa0] sm:$0xff]
    %v827 = vld [vmem:[%s176 + $0xa8] sm:$0xff]
    %v828 = vld [vmem:[%s176 + $0xb0] sm:$0xff]
    %v829 = vld [vmem:[%s176 + $0xb8] sm:$0xff]
    %v830 = vld [vmem:[%s176 + $0xc0] sm:$0xff]
    %v831 = vld [vmem:[%s176 + $0xc8] sm:$0xff]
    %v832 = vld [vmem:[%s176 + $0xd0] sm:$0xff]
    %v833 = vld [vmem:[%s176 + $0xd8] sm:$0xff]
    %v834 = vld [vmem:[%s176 + $0xe0] sm:$0xff]
    %v835 = vld [vmem:[%s176 + $0xe8] sm:$0xff]
    %v836 = vld [vmem:[%s176 + $0xf0] sm:$0xff]
    %v837 = vld [vmem:[%s176 + $0xf8] sm:$0xff]
    %s838 = scalar_lea.vmem [#allocation8], 3
    %v839 = vld [vmem:[%s838] ss:$8 sm:$0x3]
    %v841 = vlaneseq
    %v842 = vshrl.u32 %v841, 7
    %v843 = vsub.s32 0, %v842
    %v844 = vrot.slane %v839, %v843
    %v845 = vlaneseq
    %v846 = vshrl.u32 %v845, 7
    %v847 = vsub.s32 1, %v846
    %v848 = vrot.slane %v839, %v847
    %851 = vmatprep.subr.bf16.mxu0 %v807
    %852 = vmatpush1.bf16.msra.mxu0 %v806
    %853 = vmatprep.subr.bf16.mxu0 %v809
    %854 = vmatpush1.bf16.msra.mxu0 %v808
    %855 = vmatprep.subr.bf16.mxu0 %v811
    %856 = vmatpush1.bf16.msra.mxu0 %v810
    %857 = vmatprep.subr.bf16.mxu0 %v813
    %858 = vmatpush1.bf16.msra.mxu0 %v812
    %859 = vmatprep.subr.bf16.mxu0 %v815
    %860 = vmatpush1.bf16.msra.mxu0 %v814
    %861 = vmatprep.subr.bf16.mxu0 %v817
    %862 = vmatpush1.bf16.msra.mxu0 %v816
    %863 = vmatprep.subr.bf16.mxu0 %v819
    %864 = vmatpush1.bf16.msra.mxu0 %v818
    %865 = vmatprep.subr.bf16.mxu0 %v821
    %866 = vmatpush1.bf16.msra.mxu0 %v820
    %867 = vmatprep.subr.bf16.mxu0 %v823
    %868 = vmatpush1.bf16.msra.mxu0 %v822
    %869 = vmatprep.subr.bf16.mxu0 %v825
    %870 = vmatpush1.bf16.msra.mxu0 %v824
    %871 = vmatprep.subr.bf16.mxu0 %v827
    %872 = vmatpush1.bf16.msra.mxu0 %v826
    %873 = vmatprep.subr.bf16.mxu0 %v829
    %874 = vmatpush1.bf16.msra.mxu0 %v828
    %875 = vmatprep.subr.bf16.mxu0 %v831
    %876 = vmatpush1.bf16.msra.mxu0 %v830
    %877 = vmatprep.subr.bf16.mxu0 %v833
    %878 = vmatpush1.bf16.msra.mxu0 %v832
    %879 = vmatprep.subr.bf16.mxu0 %v835
    %880 = vmatpush1.bf16.msra.mxu0 %v834
    %881 = vmatprep.subr.bf16.mxu0 %v837
    %882 = vmatpush1.bf16.msra.mxu0 %v836
    %883 = vmatprep.mubr.bf16.mxu0 %v805
    %884 = vmatmul.mubr.bf16.gmra.mrb[0].mxu0 %v804
    %v885 = vpop.f32.mrb[0].mxu0
    %v886 = vadd.f32 %v844, %v885
    %v887 = vpop.f32.mrb[0].mxu0
    %v888 = vadd.f32 %v848, %v887
    %v889 = vpop.f32.mrb[0].mxu0
    %v890 = vpop.f32.mrb[0].mxu0
    %891 = vdwg.mxu0
    %v892 = vmax.f32 %v886, 0.0
    %v893 = vmax.f32 %v888, 0.0
    %s894 = sshll.u32 %s617, 4
    %895 = dma.done %s216, %s894
    %v896 = vpack.c.bf16 %v892, %v892
    %v897 = vpack.c.bf16 %v893, %v893
    %v898 = vld [vmem:[%s215] sm:$0xff]
    %v899 = vld [vmem:[%s215 + $0x8] sm:$0xff]
    %v900 = vld [vmem:[%s215 + $0x10] sm:$0xff]
    %v901 = vld [vmem:[%s215 + $0x18] sm:$0xff]
    %v902 = vld [vmem:[%s215 + $0x20] sm:$0xff]
    %v903 = vld [vmem:[%s215 + $0x28] sm:$0xff]
    %v904 = vld [vmem:[%s215 + $0x30] sm:$0xff]
    %v905 = vld [vmem:[%s215 + $0x38] sm:$0xff]
    %v906 = vld [vmem:[%s215 + $0x40] sm:$0xff]
    %v907 = vld [vmem:[%s215 + $0x48] sm:$0xff]
    %v908 = vld [vmem:[%s215 + $0x50] sm:$0xff]
    %v909 = vld [vmem:[%s215 + $0x58] sm:$0xff]
    %v910 = vld [vmem:[%s215 + $0x60] sm:$0xff]
    %v911 = vld [vmem:[%s215 + $0x68] sm:$0xff]
    %v912 = vld [vmem:[%s215 + $0x70] sm:$0xff]
    %v913 = vld [vmem:[%s215 + $0x78] sm:$0xff]
    %v914 = vld [vmem:[%s215 + $0x80] sm:$0xff]
    %v915 = vld [vmem:[%s215 + $0x88] sm:$0xff]
    %v916 = vld [vmem:[%s215 + $0x90] sm:$0xff]
    %v917 = vld [vmem:[%s215 + $0x98] sm:$0xff]
    %v918 = vld [vmem:[%s215 + $0xa0] sm:$0xff]
    %v919 = vld [vmem:[%s215 + $0xa8] sm:$0xff]
    %v920 = vld [vmem:[%s215 + $0xb0] sm:$0xff]
    %v921 = vld [vmem:[%s215 + $0xb8] sm:$0xff]
    %v922 = vld [vmem:[%s215 + $0xc0] sm:$0xff]
    %v923 = vld [vmem:[%s215 + $0xc8] sm:$0xff]
    %v924 = vld [vmem:[%s215 + $0xd0] sm:$0xff]
    %v925 = vld [vmem:[%s215 + $0xd8] sm:$0xff]
    %v926 = vld [vmem:[%s215 + $0xe0] sm:$0xff]
    %v927 = vld [vmem:[%s215 + $0xe8] sm:$0xff]
    %v928 = vld [vmem:[%s215 + $0xf0] sm:$0xff]
    %v929 = vld [vmem:[%s215 + $0xf8] sm:$0xff]
    %s930 = scalar_lea.vmem [#allocation8], 4
    %v931 = vld [vmem:[%s930] ss:$8 sm:$0x3]
    %v933 = vlaneseq
    %v934 = vshrl.u32 %v933, 7
    %v935 = vsub.s32 0, %v934
    %v936 = vrot.slane %v931, %v935
    %v937 = vlaneseq
    %v938 = vshrl.u32 %v937, 7
    %v939 = vsub.s32 1, %v938
    %v940 = vrot.slane %v931, %v939
    %943 = vmatprep.subr.bf16.mxu0 %v899
    %944 = vmatpush1.bf16.msra.mxu0 %v898
    %945 = vmatprep.subr.bf16.mxu0 %v901
    %946 = vmatpush1.bf16.msra.mxu0 %v900
    %947 = vmatprep.subr.bf16.mxu0 %v903
    %948 = vmatpush1.bf16.msra.mxu0 %v902
    %949 = vmatprep.subr.bf16.mxu0 %v905
    %950 = vmatpush1.bf16.msra.mxu0 %v904
    %951 = vmatprep.subr.bf16.mxu0 %v907
    %952 = vmatpush1.bf16.msra.mxu0 %v906
    %953 = vmatprep.subr.bf16.mxu0 %v909
    %954 = vmatpush1.bf16.msra.mxu0 %v908
    %955 = vmatprep.subr.bf16.mxu0 %v911
    %956 = vmatpush1.bf16.msra.mxu0 %v910
    %957 = vmatprep.subr.bf16.mxu0 %v913
    %958 = vmatpush1.bf16.msra.mxu0 %v912
    %959 = vmatprep.subr.bf16.mxu0 %v915
    %960 = vmatpush1.bf16.msra.mxu0 %v914
    %961 = vmatprep.subr.bf16.mxu0 %v917
    %962 = vmatpush1.bf16.msra.mxu0 %v916
    %963 = vmatprep.subr.bf16.mxu0 %v919
    %964 = vmatpush1.bf16.msra.mxu0 %v918
    %965 = vmatprep.subr.bf16.mxu0 %v921
    %966 = vmatpush1.bf16.msra.mxu0 %v920
    %967 = vmatprep.subr.bf16.mxu0 %v923
    %968 = vmatpush1.bf16.msra.mxu0 %v922
    %969 = vmatprep.subr.bf16.mxu0 %v925
    %970 = vmatpush1.bf16.msra.mxu0 %v924
    %971 = vmatprep.subr.bf16.mxu0 %v927
    %972 = vmatpush1.bf16.msra.mxu0 %v926
    %973 = vmatprep.subr.bf16.mxu0 %v929
    %974 = vmatpush1.bf16.msra.mxu0 %v928
    %975 = vmatprep.mubr.bf16.mxu0 %v897
    %976 = vmatmul.mubr.bf16.gmra.mrb[0].mxu0 %v896
    %v977 = vpop.f32.mrb[0].mxu0
    %v978 = vadd.f32 %v936, %v977
    %v979 = vpop.f32.mrb[0].mxu0
    %v980 = vadd.f32 %v940, %v979
    %v981 = vpop.f32.mrb[0].mxu0
    %v982 = vpop.f32.mrb[0].mxu0
    %983 = vdwg.mxu0
    %v984 = vmax.f32 %v978, 0.0
    %v985 = vmax.f32 %v980, 0.0
    %s986 = sshll.u32 %s617, 4
    %987 = dma.done %s255, %s986
    %v988 = vpack.c.bf16 %v984, %v984
    %v989 = vpack.c.bf16 %v985, %v985
    %v990 = vld [vmem:[%s254] sm:$0xff]
    %v991 = vld [vmem:[%s254 + $0x8] sm:$0xff]
    %v992 = vld [vmem:[%s254 + $0x10] sm:$0xff]
    %v993 = vld [vmem:[%s254 + $0x18] sm:$0xff]
    %v994 = vld [vmem:[%s254 + $0x20] sm:$0xff]
    %v995 = vld [vmem:[%s254 + $0x28] sm:$0xff]
    %v996 = vld [vmem:[%s254 + $0x30] sm:$0xff]
    %v997 = vld [vmem:[%s254 + $0x38] sm:$0xff]
    %v998 = vld [vmem:[%s254 + $0x40] sm:$0xff]
    %v999 = vld [vmem:[%s254 + $0x48] sm:$0xff]
    %v1000 = vld [vmem:[%s254 + $0x50] sm:$0xff]
    %v1001 = vld [vmem:[%s254 + $0x58] sm:$0xff]
    %v1002 = vld [vmem:[%s254 + $0x60] sm:$0xff]
    %v1003 = vld [vmem:[%s254 + $0x68] sm:$0xff]
    %v1004 = vld [vmem:[%s254 + $0x70] sm:$0xff]
    %v1005 = vld [vmem:[%s254 + $0x78] sm:$0xff]
    %v1006 = vld [vmem:[%s254 + $0x80] sm:$0xff]
    %v1007 = vld [vmem:[%s254 + $0x88] sm:$0xff]
    %v1008 = vld [vmem:[%s254 + $0x90] sm:$0xff]
    %v1009 = vld [vmem:[%s254 + $0x98] sm:$0xff]
    %v1010 = vld [vmem:[%s254 + $0xa0] sm:$0xff]
    %v1011 = vld [vmem:[%s254 + $0xa8] sm:$0xff]
    %v1012 = vld [vmem:[%s254 + $0xb0] sm:$0xff]
    %v1013 = vld [vmem:[%s254 + $0xb8] sm:$0xff]
    %v1014 = vld [vmem:[%s254 + $0xc0] sm:$0xff]
    %v1015 = vld [vmem:[%s254 + $0xc8] sm:$0xff]
    %v1016 = vld [vmem:[%s254 + $0xd0] sm:$0xff]
    %v1017 = vld [vmem:[%s254 + $0xd8] sm:$0xff]
    %v1018 = vld [vmem:[%s254 + $0xe0] sm:$0xff]
    %v1019 = vld [vmem:[%s254 + $0xe8] sm:$0xff]
    %v1020 = vld [vmem:[%s254 + $0xf0] sm:$0xff]
    %v1021 = vld [vmem:[%s254 + $0xf8] sm:$0xff]
    %1022 = vmatprep.subr.bf16.mxu0 %v991
    %1023 = vmatpush1.bf16.msra.mxu0 %v990
    %1024 = vmatprep.subr.bf16.mxu0 %v993
    %1025 = vmatpush1.bf16.msra.mxu0 %v992
    %1026 = vmatprep.subr.bf16.mxu0 %v995
    %1027 = vmatpush1.bf16.msra.mxu0 %v994
    %1028 = vmatprep.subr.bf16.mxu0 %v997
    %1029 = vmatpush1.bf16.msra.mxu0 %v996
    %1030 = vmatprep.subr.bf16.mxu0 %v999
    %1031 = vmatpush1.bf16.msra.mxu0 %v998
    %1032 = vmatprep.subr.bf16.mxu0 %v1001
    %1033 = vmatpush1.bf16.msra.mxu0 %v1000
    %1034 = vmatprep.subr.bf16.mxu0 %v1003
    %1035 = vmatpush1.bf16.msra.mxu0 %v1002
    %1036 = vmatprep.subr.bf16.mxu0 %v1005
    %1037 = vmatpush1.bf16.msra.mxu0 %v1004
    %1038 = vmatprep.subr.bf16.mxu0 %v1007
    %1039 = vmatpush1.bf16.msra.mxu0 %v1006
    %1040 = vmatprep.subr.bf16.mxu0 %v1009
    %1041 = vmatpush1.bf16.msra.mxu0 %v1008
    %1042 = vmatprep.subr.bf16.mxu0 %v1011
    %1043 = vmatpush1.bf16.msra.mxu0 %v1010
    %1044 = vmatprep.subr.bf16.mxu0 %v1013
    %1045 = vmatpush1.bf16.msra.mxu0 %v1012
    %1046 = vmatprep.subr.bf16.mxu0 %v1015
    %1047 = vmatpush1.bf16.msra.mxu0 %v1014
    %1048 = vmatprep.subr.bf16.mxu0 %v1017
    %1049 = vmatpush1.bf16.msra.mxu0 %v1016
    %1050 = vmatprep.subr.bf16.mxu0 %v1019
    %1051 = vmatpush1.bf16.msra.mxu0 %v1018
    %1052 = vmatprep.subr.bf16.mxu0 %v1021
    %1053 = vmatpush1.bf16.msra.mxu0 %v1020
    %1054 = vmatprep.mubr.bf16.mxu0 %v989
    %1055 = vmatmul.mubr.bf16.gmra.mrb[0].mxu0 %v988
    %v1056 = vpop.f32.mrb[0].mxu0
    %v1057 = vadd.f32 %v594, %v1056
    %v1058 = vpop.f32.mrb[0].mxu0
    %v1059 = vadd.f32 %v596, %v1058
    %v1060 = vpop.f32.mrb[0].mxu0
    %v1061 = vpop.f32.mrb[0].mxu0
    %1062 = vdwg.mxu0
    %s1063 = scalar_lea.vmem [#allocation8], 5
    %v1064 = vld [vmem:[%s1063] ss:$8 sm:$0x3]
    %v1066 = vlaneseq
    %v1067 = vshrl.u32 %v1066, 7
    %v1068 = vsub.s32 0, %v1067
    %v1069 = vrot.slane %v1064, %v1068
    %v1070 = vlaneseq
    %v1071 = vshrl.u32 %v1070, 7
    %v1072 = vsub.s32 1, %v1071
    %v1073 = vrot.slane %v1064, %v1072
    %v1076 = vadd.f32 %v1057, %v1069
    %v1077 = vadd.f32 %v1059, %v1073
    %v1078 = vmax.f32 %v1076, 0.0
    %v1079 = vmax.f32 %v1077, 0.0
    %s1080 = sshll.u32 %s617, 4
    %1081 = dma.done %s294, %s1080
    %v1082 = vpack.c.bf16 %v1078, %v1078
    %v1083 = vpack.c.bf16 %v1079, %v1079
    %v1084 = vld [vmem:[%s293] sm:$0xff]
    %v1085 = vld [vmem:[%s293 + $0x8] sm:$0xff]
    %v1086 = vld [vmem:[%s293 + $0x10] sm:$0xff]
    %v1087 = vld [vmem:[%s293 + $0x18] sm:$0xff]
    %v1088 = vld [vmem:[%s293 + $0x20] sm:$0xff]
    %v1089 = vld [vmem:[%s293 + $0x28] sm:$0xff]
    %v1090 = vld [vmem:[%s293 + $0x30] sm:$0xff]
    %v1091 = vld [vmem:[%s293 + $0x38] sm:$0xff]
    %v1092 = vld [vmem:[%s293 + $0x40] sm:$0xff]
    %v1093 = vld [vmem:[%s293 + $0x48] sm:$0xff]
    %v1094 = vld [vmem:[%s293 + $0x50] sm:$0xff]
    %v1095 = vld [vmem:[%s293 + $0x58] sm:$0xff]
    %v1096 = vld [vmem:[%s293 + $0x60] sm:$0xff]
    %v1097 = vld [vmem:[%s293 + $0x68] sm:$0xff]
    %v1098 = vld [vmem:[%s293 + $0x70] sm:$0xff]
    %v1099 = vld [vmem:[%s293 + $0x78] sm:$0xff]
    %v1100 = vld [vmem:[%s293 + $0x80] sm:$0xff]
    %v1101 = vld [vmem:[%s293 + $0x88] sm:$0xff]
    %v1102 = vld [vmem:[%s293 + $0x90] sm:$0xff]
    %v1103 = vld [vmem:[%s293 + $0x98] sm:$0xff]
    %v1104 = vld [vmem:[%s293 + $0xa0] sm:$0xff]
    %v1105 = vld [vmem:[%s293 + $0xa8] sm:$0xff]
    %v1106 = vld [vmem:[%s293 + $0xb0] sm:$0xff]
    %v1107 = vld [vmem:[%s293 + $0xb8] sm:$0xff]
    %v1108 = vld [vmem:[%s293 + $0xc0] sm:$0xff]
    %v1109 = vld [vmem:[%s293 + $0xc8] sm:$0xff]
    %v1110 = vld [vmem:[%s293 + $0xd0] sm:$0xff]
    %v1111 = vld [vmem:[%s293 + $0xd8] sm:$0xff]
    %v1112 = vld [vmem:[%s293 + $0xe0] sm:$0xff]
    %v1113 = vld [vmem:[%s293 + $0xe8] sm:$0xff]
    %v1114 = vld [vmem:[%s293 + $0xf0] sm:$0xff]
    %v1115 = vld [vmem:[%s293 + $0xf8] sm:$0xff]
    %s1116 = scalar_lea.vmem [#allocation8], 6
    %v1117 = vld [vmem:[%s1116] ss:$8 sm:$0x3]
    %v1119 = vlaneseq
    %v1120 = vshrl.u32 %v1119, 7
    %v1121 = vsub.s32 0, %v1120
    %v1122 = vrot.slane %v1117, %v1121
    %v1123 = vlaneseq
    %v1124 = vshrl.u32 %v1123, 7
    %v1125 = vsub.s32 1, %v1124
    %v1126 = vrot.slane %v1117, %v1125
    %1129 = vmatprep.subr.bf16.mxu0 %v1085
    %1130 = vmatpush1.bf16.msra.mxu0 %v1084
    %1131 = vmatprep.subr.bf16.mxu0 %v1087
    %1132 = vmatpush1.bf16.msra.mxu0 %v1086
    %1133 = vmatprep.subr.bf16.mxu0 %v1089
    %1134 = vmatpush1.bf16.msra.mxu0 %v1088
    %1135 = vmatprep.subr.bf16.mxu0 %v1091
    %1136 = vmatpush1.bf16.msra.mxu0 %v1090
    %1137 = vmatprep.subr.bf16.mxu0 %v1093
    %1138 = vmatpush1.bf16.msra.mxu0 %v1092
    %1139 = vmatprep.subr.bf16.mxu0 %v1095
    %1140 = vmatpush1.bf16.msra.mxu0 %v1094
    %1141 = vmatprep.subr.bf16.mxu0 %v1097
    %1142 = vmatpush1.bf16.msra.mxu0 %v1096
    %1143 = vmatprep.subr.bf16.mxu0 %v1099
    %1144 = vmatpush1.bf16.msra.mxu0 %v1098
    %1145 = vmatprep.subr.bf16.mxu0 %v1101
    %1146 = vmatpush1.bf16.msra.mxu0 %v1100
    %1147 = vmatprep.subr.bf16.mxu0 %v1103
    %1148 = vmatpush1.bf16.msra.mxu0 %v1102
    %1149 = vmatprep.subr.bf16.mxu0 %v1105
    %1150 = vmatpush1.bf16.msra.mxu0 %v1104
    %1151 = vmatprep.subr.bf16.mxu0 %v1107
    %1152 = vmatpush1.bf16.msra.mxu0 %v1106
    %1153 = vmatprep.subr.bf16.mxu0 %v1109
    %1154 = vmatpush1.bf16.msra.mxu0 %v1108
    %1155 = vmatprep.subr.bf16.mxu0 %v1111
    %1156 = vmatpush1.bf16.msra.mxu0 %v1110
    %1157 = vmatprep.subr.bf16.mxu0 %v1113
    %1158 = vmatpush1.bf16.msra.mxu0 %v1112
    %1159 = vmatprep.subr.bf16.mxu0 %v1115
    %1160 = vmatpush1.bf16.msra.mxu0 %v1114
    %1161 = vmatprep.mubr.bf16.mxu0 %v1083
    %1162 = vmatmul.mubr.bf16.gmra.mrb[0].mxu0 %v1082
    %v1163 = vpop.f32.mrb[0].mxu0
    %v1164 = vadd.f32 %v1122, %v1163
    %v1165 = vpop.f32.mrb[0].mxu0
    %v1166 = vadd.f32 %v1126, %v1165
    %v1167 = vpop.f32.mrb[0].mxu0
    %v1168 = vpop.f32.mrb[0].mxu0
    %1169 = vdwg.mxu0
    %v1170 = vmax.f32 %v1164, 0.0
    %v1171 = vmax.f32 %v1166, 0.0
    %s1172 = sshll.u32 %s617, 4
    %1173 = dma.done %s333, %s1172
    %v1174 = vpack.c.bf16 %v1170, %v1170
    %v1175 = vpack.c.bf16 %v1171, %v1171
    %v1176 = vld [vmem:[%s332] sm:$0xff]
    %v1177 = vld [vmem:[%s332 + $0x8] sm:$0xff]
    %v1178 = vld [vmem:[%s332 + $0x10] sm:$0xff]
    %v1179 = vld [vmem:[%s332 + $0x18] sm:$0xff]
    %v1180 = vld [vmem:[%s332 + $0x20] sm:$0xff]
    %v1181 = vld [vmem:[%s332 + $0x28] sm:$0xff]
    %v1182 = vld [vmem:[%s332 + $0x30] sm:$0xff]
    %v1183 = vld [vmem:[%s332 + $0x38] sm:$0xff]
    %v1184 = vld [vmem:[%s332 + $0x40] sm:$0xff]
    %v1185 = vld [vmem:[%s332 + $0x48] sm:$0xff]
    %v1186 = vld [vmem:[%s332 + $0x50] sm:$0xff]
    %v1187 = vld [vmem:[%s332 + $0x58] sm:$0xff]
    %v1188 = vld [vmem:[%s332 + $0x60] sm:$0xff]
    %v1189 = vld [vmem:[%s332 + $0x68] sm:$0xff]
    %v1190 = vld [vmem:[%s332 + $0x70] sm:$0xff]
    %v1191 = vld [vmem:[%s332 + $0x78] sm:$0xff]
    %v1192 = vld [vmem:[%s332 + $0x80] sm:$0xff]
    %v1193 = vld [vmem:[%s332 + $0x88] sm:$0xff]
    %v1194 = vld [vmem:[%s332 + $0x90] sm:$0xff]
    %v1195 = vld [vmem:[%s332 + $0x98] sm:$0xff]
    %v1196 = vld [vmem:[%s332 + $0xa0] sm:$0xff]
    %v1197 = vld [vmem:[%s332 + $0xa8] sm:$0xff]
    %v1198 = vld [vmem:[%s332 + $0xb0] sm:$0xff]
    %v1199 = vld [vmem:[%s332 + $0xb8] sm:$0xff]
    %v1200 = vld [vmem:[%s332 + $0xc0] sm:$0xff]
    %v1201 = vld [vmem:[%s332 + $0xc8] sm:$0xff]
    %v1202 = vld [vmem:[%s332 + $0xd0] sm:$0xff]
    %v1203 = vld [vmem:[%s332 + $0xd8] sm:$0xff]
    %v1204 = vld [vmem:[%s332 + $0xe0] sm:$0xff]
    %v1205 = vld [vmem:[%s332 + $0xe8] sm:$0xff]
    %v1206 = vld [vmem:[%s332 + $0xf0] sm:$0xff]
    %v1207 = vld [vmem:[%s332 + $0xf8] sm:$0xff]
    %s1208 = scalar_lea.vmem [#allocation8], 7
    %v1209 = vld [vmem:[%s1208] ss:$8 sm:$0x3]
    %v1211 = vlaneseq
    %v1212 = vshrl.u32 %v1211, 7
    %v1213 = vsub.s32 0, %v1212
    %v1214 = vrot.slane %v1209, %v1213
    %v1215 = vlaneseq
    %v1216 = vshrl.u32 %v1215, 7
    %v1217 = vsub.s32 1, %v1216
    %v1218 = vrot.slane %v1209, %v1217
    %1221 = vmatprep.subr.bf16.mxu0 %v1177
    %1222 = vmatpush1.bf16.msra.mxu0 %v1176
    %1223 = vmatprep.subr.bf16.mxu0 %v1179
    %1224 = vmatpush1.bf16.msra.mxu0 %v1178
    %1225 = vmatprep.subr.bf16.mxu0 %v1181
    %1226 = vmatpush1.bf16.msra.mxu0 %v1180
    %1227 = vmatprep.subr.bf16.mxu0 %v1183
    %1228 = vmatpush1.bf16.msra.mxu0 %v1182
    %1229 = vmatprep.subr.bf16.mxu0 %v1185
    %1230 = vmatpush1.bf16.msra.mxu0 %v1184
    %1231 = vmatprep.subr.bf16.mxu0 %v1187
    %1232 = vmatpush1.bf16.msra.mxu0 %v1186
    %1233 = vmatprep.subr.bf16.mxu0 %v1189
    %1234 = vmatpush1.bf16.msra.mxu0 %v1188
    %1235 = vmatprep.subr.bf16.mxu0 %v1191
    %1236 = vmatpush1.bf16.msra.mxu0 %v1190
    %1237 = vmatprep.subr.bf16.mxu0 %v1193
    %1238 = vmatpush1.bf16.msra.mxu0 %v1192
    %1239 = vmatprep.subr.bf16.mxu0 %v1195
    %1240 = vmatpush1.bf16.msra.mxu0 %v1194
    %1241 = vmatprep.subr.bf16.mxu0 %v1197
    %1242 = vmatpush1.bf16.msra.mxu0 %v1196
    %1243 = vmatprep.subr.bf16.mxu0 %v1199
    %1244 = vmatpush1.bf16.msra.mxu0 %v1198
    %1245 = vmatprep.subr.bf16.mxu0 %v1201
    %1246 = vmatpush1.bf16.msra.mxu0 %v1200
    %1247 = vmatprep.subr.bf16.mxu0 %v1203
    %1248 = vmatpush1.bf16.msra.mxu0 %v1202
    %1249 = vmatprep.subr.bf16.mxu0 %v1205
    %1250 = vmatpush1.bf16.msra.mxu0 %v1204
    %1251 = vmatprep.subr.bf16.mxu0 %v1207
    %1252 = vmatpush1.bf16.msra.mxu0 %v1206
    %1253 = vmatprep.mubr.bf16.mxu0 %v1175
    %1254 = vmatmul.mubr.bf16.gmra.mrb[0].mxu0 %v1174
    %v1255 = vpop.f32.mrb[0].mxu0
    %v1256 = vadd.f32 %v1214, %v1255
    %v1257 = vpop.f32.mrb[0].mxu0
    %v1258 = vadd.f32 %v1218, %v1257
    %v1259 = vpop.f32.mrb[0].mxu0
    %v1260 = vpop.f32.mrb[0].mxu0
    %1261 = vdwg.mxu0
    %v1262 = vmax.f32 %v1256, 0.0
    %v1263 = vmax.f32 %v1258, 0.0
    %v1264 = vld [vmem:[%s91] sm:$0xff]
    %v1265 = vld [vmem:[%s91 + $0x8] sm:$0xff]
    %v1266 = vld [vmem:[%s91 + $0x10] sm:$0xff]
    %v1267 = vld [vmem:[%s91 + $0x18] sm:$0xff]
    %v1268 = vld [vmem:[%s91 + $0x20] sm:$0xff]
    %v1269 = vld [vmem:[%s91 + $0x28] sm:$0xff]
    %v1270 = vld [vmem:[%s91 + $0x30] sm:$0xff]
    %v1271 = vld [vmem:[%s91 + $0x38] sm:$0xff]
    %v1272 = vld [vmem:[%s91 + $0x40] sm:$0xff]
    %v1273 = vld [vmem:[%s91 + $0x48] sm:$0xff]
    %v1274 = vld [vmem:[%s91 + $0x50] sm:$0xff]
    %v1275 = vld [vmem:[%s91 + $0x58] sm:$0xff]
    %v1276 = vld [vmem:[%s91 + $0x60] sm:$0xff]
    %v1277 = vld [vmem:[%s91 + $0x68] sm:$0xff]
    %v1278 = vld [vmem:[%s91 + $0x70] sm:$0xff]
    %v1279 = vld [vmem:[%s91 + $0x78] sm:$0xff]
    %v1280 = vld [vmem:[%s91 + $0x80] sm:$0xff]
    %v1281 = vld [vmem:[%s91 + $0x88] sm:$0xff]
    %v1282 = vld [vmem:[%s91 + $0x90] sm:$0xff]
    %v1283 = vld [vmem:[%s91 + $0x98] sm:$0xff]
    %v1284 = vld [vmem:[%s91 + $0xa0] sm:$0xff]
    %v1285 = vld [vmem:[%s91 + $0xa8] sm:$0xff]
    %v1286 = vld [vmem:[%s91 + $0xb0] sm:$0xff]
    %v1287 = vld [vmem:[%s91 + $0xb8] sm:$0xff]
    %v1288 = vld [vmem:[%s91 + $0xc0] sm:$0xff]
    %v1289 = vld [vmem:[%s91 + $0xc8] sm:$0xff]
    %v1290 = vld [vmem:[%s91 + $0xd0] sm:$0xff]
    %v1291 = vld [vmem:[%s91 + $0xd8] sm:$0xff]
    %v1292 = vld [vmem:[%s91 + $0xe0] sm:$0xff]
    %v1293 = vld [vmem:[%s91 + $0xe8] sm:$0xff]
    %v1294 = vld [vmem:[%s91 + $0xf0] sm:$0xff]
    %v1295 = vld [vmem:[%s91 + $0xf8] sm:$0xff]
    %v1296 = vld [vmem:[#allocation10] sm:$0x1]
    %v1298 = vlaneseq
    %v1299 = vshrl.u32 %v1298, 7
    %v1300 = vsub.s32 0, %v1299
    %v1301 = vrot.slane %v1296, %v1300
    %1303 = vmatprep.subr.mxu0 0.0
    %1304 = vmatpush1.msra.mxu0 %v1264
    %1305 = vmatprep.subr.mxu0 0.0
    %1306 = vmatpush1.msra.mxu0 %v1265
    %1307 = vmatprep.subr.mxu0 0.0
    %1308 = vmatpush1.msra.mxu0 %v1266
    %1309 = vmatprep.subr.mxu0 0.0
    %1310 = vmatpush1.msra.mxu0 %v1267
    %1311 = vmatprep.subr.mxu0 0.0
    %1312 = vmatpush1.msra.mxu0 %v1268
    %1313 = vmatprep.subr.mxu0 0.0
    %1314 = vmatpush1.msra.mxu0 %v1269
    %1315 = vmatprep.subr.mxu0 0.0
    %1316 = vmatpush1.msra.mxu0 %v1270
    %1317 = vmatprep.subr.mxu0 0.0
    %1318 = vmatpush1.msra.mxu0 %v1271
    %1319 = vmatprep.subr.mxu0 0.0
    %1320 = vmatpush1.msra.mxu0 %v1272
    %1321 = vmatprep.subr.mxu0 0.0
    %1322 = vmatpush1.msra.mxu0 %v1273
    %1323 = vmatprep.subr.mxu0 0.0
    %1324 = vmatpush1.msra.mxu0 %v1274
    %1325 = vmatprep.subr.mxu0 0.0
    %1326 = vmatpush1.msra.mxu0 %v1275
    %1327 = vmatprep.subr.mxu0 0.0
    %1328 = vmatpush1.msra.mxu0 %v1276
    %1329 = vmatprep.subr.mxu0 0.0
    %1330 = vmatpush1.msra.mxu0 %v1277
    %1331 = vmatprep.subr.mxu0 0.0
    %1332 = vmatpush1.msra.mxu0 %v1278
    %1333 = vmatprep.subr.mxu0 0.0
    %1334 = vmatpush1.msra.mxu0 %v1279
    %1335 = vmatprep.subr.mxu0 0.0
    %1336 = vmatpush1.msra.mxu0 %v1280
    %1337 = vmatprep.subr.mxu0 0.0
    %1338 = vmatpush1.msra.mxu0 %v1281
    %1339 = vmatprep.subr.mxu0 0.0
    %1340 = vmatpush1.msra.mxu0 %v1282
    %1341 = vmatprep.subr.mxu0 0.0
    %1342 = vmatpush1.msra.mxu0 %v1283
    %1343 = vmatprep.subr.mxu0 0.0
    %1344 = vmatpush1.msra.mxu0 %v1284
    %1345 = vmatprep.subr.mxu0 0.0
    %1346 = vmatpush1.msra.mxu0 %v1285
    %1347 = vmatprep.subr.mxu0 0.0
    %1348 = vmatpush1.msra.mxu0 %v1286
    %1349 = vmatprep.subr.mxu0 0.0
    %1350 = vmatpush1.msra.mxu0 %v1287
    %1351 = vmatprep.subr.mxu0 0.0
    %1352 = vmatpush1.msra.mxu0 %v1288
    %1353 = vmatprep.subr.mxu0 0.0
    %1354 = vmatpush1.msra.mxu0 %v1289
    %1355 = vmatprep.subr.mxu0 0.0
    %1356 = vmatpush1.msra.mxu0 %v1290
    %1357 = vmatprep.subr.mxu0 0.0
    %1358 = vmatpush1.msra.mxu0 %v1291
    %1359 = vmatprep.subr.mxu0 0.0
    %1360 = vmatpush1.msra.mxu0 %v1292
    %1361 = vmatprep.subr.mxu0 0.0
    %1362 = vmatpush1.msra.mxu0 %v1293
    %1363 = vmatprep.subr.mxu0 0.0
    %1364 = vmatpush1.msra.mxu0 %v1294
    %1365 = vmatprep.subr.mxu0 0.0
    %1366 = vmatpush1.msra.mxu0 %v1295
    %1367 = vmatprep.mubr.f32.mxu0 %v1263
    %1368 = vmatmul.mubr.f32.gmra.mrb[0].mxu0 %v1262
    %v1369 = vpop.f32.mrb[0].mxu0
    %v1370 = vadd.f32 %v1301, %v1369
    %v1371 = vpop.f32.mrb[0].mxu0
    %1372 = vdwg.mxu0
    %vm1373 = vcmask 64512
    %1374 = vst.msk [vmem:[%s7] sm:$0xff] %vm1373, %v1370
    // Predicated region
    $region34: #{seg_deep_pixel_pose_forward.1} parent=1 // pred_check
      _
    $region35: #{seg_deep_pixel_pose_forward.1} parent=1 // pred_check_branch
      %1376 = sbr.rel (0) target = $region37
    $region36: #{seg_deep_pixel_pose_forward.1} parent=1 // pred_region
      _
    $region37: #{seg_deep_pixel_pose_forward.1} parent=1 // pred_fallthru
      _
    // Predicated region
    $region38: #{seg_deep_pixel_pose_forward.1} parent=1 // pred_check
      _
    $region39: #{seg_deep_pixel_pose_forward.1} parent=1 // pred_check_branch
      %1378 = sbr.rel (0) target = $region41
    $region40: #{seg_deep_pixel_pose_forward.1} parent=1 // pred_region
      _
    $region41: #{seg_deep_pixel_pose_forward.1} parent=1 // pred_fallthru
      _
    %1379 = vsyncpa [#allocation7], 1
    %1380 = vsyncpa [#allocation9], 1
  %1381 = vsyncmov [#allocation3]
  %s1382 = vpop.sfrf %1381
  %p1383 = scmp.eq.s32.totalorder %s1382, 0
  %p1384 = pneg %p1383
  %1386 = shalt.err (%p1384)
  %s1387 = scalar_lea.sflag [#allocation3], 1
  %1388 = vsyncmov %s1387
  %s1389 = vpop.sfrf %1388
  %p1390 = scmp.eq.s32.totalorder %s1389, 0
  %p1391 = pneg %p1390
  %1393 = shalt.err (%p1391)
  %s1394 = scalar_lea.sflag [#allocation3], 2
  %1395 = vsyncmov %s1394
  %s1396 = vpop.sfrf %1395
  %p1397 = scmp.eq.s32.totalorder %s1396, 0
  %p1398 = pneg %p1397
  %1400 = shalt.err (%p1398)
  %s1401 = scalar_lea.sflag [#allocation3], 3
  %1402 = vsyncmov %s1401
  %s1403 = vpop.sfrf %1402
  %p1404 = scmp.eq.s32.totalorder %s1403, 0
  %p1405 = pneg %p1404
  %1407 = shalt.err (%p1405)
  %s1408 = scalar_lea.sflag [#allocation3], 4
  %1409 = vsyncmov %s1408
  %s1410 = vpop.sfrf %1409
  %p1411 = scmp.eq.s32.totalorder %s1410, 0
  %p1412 = pneg %p1411
  %1414 = shalt.err (%p1412)
  %s1415 = scalar_lea.sflag [#allocation3], 5
  %1416 = vsyncmov %s1415
  %s1417 = vpop.sfrf %1416
  %p1418 = scmp.eq.s32.totalorder %s1417, 0
  %p1419 = pneg %p1418
  %1421 = shalt.err (%p1419)
  %s1422 = scalar_lea.sflag [#allocation3], 6
  %1423 = vsyncmov %s1422
  %s1424 = vpop.sfrf %1423
  %p1425 = scmp.eq.s32.totalorder %s1424, 0
  %p1426 = pneg %p1425
  %1428 = shalt.err (%p1426)

</llo_original>
